<compile_context>
chip_gen: v6e
topology: v6e:2x2x1
jax: 0.10.0
libtpu: 0.0.40
codegen_flags: <defaults>
</compile_context>

<pallas_src>
import functools
import jax
import jax.numpy as jnp
from jax import lax
from jax.experimental import pallas as pl
from jax.experimental.pallas import tpu as pltpu


# --------------------------- K1: RMSNorm + fused QKV + RoPE ---------------------------
def ln_qkv_rope_kernel(x_ref, ln1_ref, wqkv_ref, cq_ref, sq_ref, ck_ref, sk_ref,
                       q_ref, k_ref, v_ref, hn_ref, *, head_dim, eps):
    # RMSNorm of the (tS, H) hidden tile is computed once per (batch, seq-tile)
    # and cached in VMEM scratch; the head axis (last grid dim, "arbitrary") reuses it.
    @pl.when(pl.program_id(2) == 0)
    def _():
        xf = x_ref[0].astype(jnp.float32)
        var = jnp.mean(xf * xf, axis=-1, keepdims=True)
        hn = (xf * lax.rsqrt(var + eps)) * ln1_ref[0].astype(jnp.float32)
        hn_ref[...] = hn.astype(hn_ref.dtype)

    hd = head_dim
    # one MXU push per head: (tS, H) @ (H, 3*hd) -> [q | k | v] columns for this head
    qkv = jnp.dot(hn_ref[...], wqkv_ref[...], preferred_element_type=jnp.float32)
    qh = qkv[:, :hd]
    kh = qkv[:, hd:2 * hd]
    vh = qkv[:, 2 * hd:]

    # rotate_half(x) == roll(x, hd/2) * [-1,...,-1, +1,...,+1]; the sign (and the
    # 1/sqrt(hd) attention scaling for q) is pre-folded into the sin/cos tables.
    q_rot = qh * cq_ref[...] + pltpu.roll(qh, hd // 2, axis=1) * sq_ref[...]
    k_rot = kh * ck_ref[...] + pltpu.roll(kh, hd // 2, axis=1) * sk_ref[...]

    q_ref[0] = q_rot.astype(q_ref.dtype)
    k_ref[0] = k_rot.astype(k_ref.dtype)
    v_ref[0] = vh.astype(v_ref.dtype)


# --------------------------- K2: causal flash attention ---------------------------
def flash_attn_kernel(q_ref, k_ref, v_ref, o_ref, m_ref, l_ref, acc_ref,
                      *, block_q, block_kv):
    kv = pl.program_id(3)

    @pl.when(kv == 0)
    def _():
        m_ref[...] = jnp.full(m_ref.shape, -jnp.inf, m_ref.dtype)
        l_ref[...] = jnp.zeros(l_ref.shape, l_ref.dtype)
        acc_ref[...] = jnp.zeros(acc_ref.shape, acc_ref.dtype)

    q_start = pl.program_id(2) * block_q
    k_start = kv * block_kv

    # skip KV tiles that lie entirely above the causal diagonal (~2x fewer score FLOPs)
    @pl.when(k_start <= q_start + block_q - 1)
    def _():
        q = q_ref[0]                                                    # (tQ, hd), pre-scaled
        s = jnp.dot(q, k_ref[0].T, preferred_element_type=jnp.float32)  # (tQ, tKV)
        row = q_start + lax.broadcasted_iota(jnp.int32, s.shape, 0)
        col = k_start + lax.broadcasted_iota(jnp.int32, s.shape, 1)
        s = jnp.where(col > row, -jnp.inf, s)

        m_prev = m_ref[...]
        m_new = jnp.maximum(m_prev, jnp.max(s, axis=-1, keepdims=True))
        alpha = jnp.exp(m_prev - m_new)
        p = jnp.exp(s - m_new)
        l_ref[...] = alpha * l_ref[...] + jnp.sum(p, axis=-1, keepdims=True)
        acc_ref[...] = alpha * acc_ref[...] + jnp.dot(
            p.astype(v_ref.dtype), v_ref[0], preferred_element_type=jnp.float32)
        m_ref[...] = m_new

    @pl.when(kv == pl.num_programs(3) - 1)
    def _():
        # exact reciprocal for tight numerics (approx=True -> EUP offload in production)
        inv_l = pl.reciprocal(l_ref[...], approx=False)
        o_ref[0] = (acc_ref[...] * inv_l).astype(o_ref.dtype)


# ----------- K3: O-proj + residual + RMSNorm + SwiGLU MLP (I-tiled) + residual -----------
def oproj_mlp_kernel(attn_ref, x_ref, wo_ref, ln2_ref, wg_ref, wu_ref, wd_ref,
                     o_ref, hn_ref, acc_ref, *, eps):
    i = pl.program_id(2)

    @pl.when(i == 0)
    def _():
        # O projection + residual, then post-attention RMSNorm; both cached in VMEM
        # scratch and reused across the intermediate-dim reduction axis.
        h2 = x_ref[0].astype(jnp.float32) + jnp.dot(
            attn_ref[0], wo_ref[...], preferred_element_type=jnp.float32)
        acc_ref[...] = h2                           # residual seeds the accumulator
        var = jnp.mean(h2 * h2, axis=-1, keepdims=True)
        hn = (h2 * lax.rsqrt(var + eps)) * ln2_ref[0].astype(jnp.float32)
        hn_ref[...] = hn.astype(hn_ref.dtype)

    hn = hn_ref[...]
    g = jnp.dot(hn, wg_ref[...], preferred_element_type=jnp.float32)   # (tS, tI)
    u = jnp.dot(hn, wu_ref[...], preferred_element_type=jnp.float32)
    g = g * (1.0 / (1.0 + jnp.exp(-g)))                                # SiLU
    acc_ref[...] += jnp.dot((g * u).astype(wd_ref.dtype), wd_ref[...],
                            preferred_element_type=jnp.float32)

    @pl.when(i == pl.num_programs(2) - 1)
    def _():
        o_ref[0] = acc_ref[...].astype(o_ref.dtype)


# ------------------------------------ wrapper ------------------------------------
def llama_decoder_layer(x, params, *, num_heads, head_dim, eps,
                        block_s=128, block_q=128, block_kv=128, block_i=512):
    B, S, H = x.shape
    nh, hd = num_heads, head_dim
    I = params["wg"].shape[1]
    assert H == nh * hd
    block_s, block_q = min(block_s, S), min(block_q, S)
    block_kv, block_i = min(block_kv, S), min(block_i, I)
    assert S % block_s == 0 and S % block_q == 0 and S % block_kv == 0
    assert I % block_i == 0 and block_i % 128 == 0
    assert block_s % 8 == 0 and block_q % 8 == 0 and block_kv % 8 == 0
    assert hd % 128 == 0, "head_dim must be lane-aligned (real Llama uses 128)"

    dt = x.dtype
    scale = hd ** -0.5

    # host-side one-off prep: fused per-head [Wq|Wk|Wv] weight, signed/pre-scaled RoPE tables
    wq3 = params["wq"].reshape(H, nh, hd)
    wk3 = params["wk"].reshape(H, nh, hd)
    wv3 = params["wv"].reshape(H, nh, hd)
    wqkv = jnp.stack([wq3, wk3, wv3], axis=2).reshape(H, nh * 3 * hd)

    sign = jnp.concatenate([-jnp.ones((hd // 2,), dt), jnp.ones((hd // 2,), dt)])
    cos_k = params["cos"].astype(dt)
    sin_k = (params["sin"] * sign).astype(dt)       # signed sin (rotate_half via roll)
    cos_q = (cos_k * scale).astype(dt)              # fold 1/sqrt(hd) into q's tables
    sin_q = (sin_k * scale).astype(dt)

    def cparams(sem):
        return pltpu.CompilerParams(dimension_semantics=sem,
                                    vmem_limit_bytes=48 * 1024 * 1024)

    n_s, n_q, n_kv, n_i = S // block_s, S // block_q, S // block_kv, I // block_i

    # ---- K1 ----
    q, k, v = pl.pallas_call(
        functools.partial(ln_qkv_rope_kernel, head_dim=hd, eps=eps),
        out_shape=(jax.ShapeDtypeStruct((B, S, H), dt),) * 3,
        grid_spec=pltpu.PrefetchScalarGridSpec(
            num_scalar_prefetch=0,
            grid=(B, n_s, nh),
            in_specs=[
                pl.BlockSpec((1, block_s, H), lambda b, s, h: (b, s, 0)),   # x tile
                pl.BlockSpec((1, H), lambda b, s, h: (0, 0)),               # ln1
                pl.BlockSpec((H, 3 * hd), lambda b, s, h: (0, h)),          # fused Wqkv head tile
                pl.BlockSpec((block_s, hd), lambda b, s, h: (s, 0)),        # cos * scale
                pl.BlockSpec((block_s, hd), lambda b, s, h: (s, 0)),        # signed sin * scale
                pl.BlockSpec((block_s, hd), lambda b, s, h: (s, 0)),        # cos
                pl.BlockSpec((block_s, hd), lambda b, s, h: (s, 0)),        # signed sin
            ],
            out_specs=[pl.BlockSpec((1, block_s, hd), lambda b, s, h: (b, s, h))] * 3,
            scratch_shapes=[pltpu.VMEM((block_s, H), dt)],
        ),
        compiler_params=cparams(("parallel", "parallel", "arbitrary")),
    )(x, params["ln1"], wqkv, cos_q, sin_q, cos_k, sin_k)

    # ---- K2 ----
    attn = pl.pallas_call(
        functools.partial(flash_attn_kernel, block_q=block_q, block_kv=block_kv),
        out_shape=jax.ShapeDtypeStruct((B, S, H), dt),
        grid_spec=pltpu.PrefetchScalarGridSpec(
            num_scalar_prefetch=0,
            grid=(B, nh, n_q, n_kv),
            in_specs=[
                pl.BlockSpec((1, block_q, hd), lambda b, h, qi, ki: (b, qi, h)),
                pl.BlockSpec((1, block_kv, hd), lambda b, h, qi, ki: (b, ki, h)),
                pl.BlockSpec((1, block_kv, hd), lambda b, h, qi, ki: (b, ki, h)),
            ],
            out_specs=pl.BlockSpec((1, block_q, hd), lambda b, h, qi, ki: (b, qi, h)),
            scratch_shapes=[pltpu.VMEM((block_q, 1), jnp.float32),
                            pltpu.VMEM((block_q, 1), jnp.float32),
                            pltpu.VMEM((block_q, hd), jnp.float32)],
        ),
        compiler_params=cparams(("parallel", "parallel", "parallel", "arbitrary")),
    )(q, k, v)

    # ---- K3 ----
    out = pl.pallas_call(
        functools.partial(oproj_mlp_kernel, eps=eps),
        out_shape=jax.ShapeDtypeStruct((B, S, H), dt),
        grid_spec=pltpu.PrefetchScalarGridSpec(
            num_scalar_prefetch=0,
            grid=(B, n_s, n_i),
            in_specs=[
                pl.BlockSpec((1, block_s, H), lambda b, s, i: (b, s, 0)),   # attention output
                pl.BlockSpec((1, block_s, H), lambda b, s, i: (b, s, 0)),   # x (residual)
                pl.BlockSpec((H, H), lambda b, s, i: (0, 0)),               # Wo
                pl.BlockSpec((1, H), lambda b, s, i: (0, 0)),               # ln2
                pl.BlockSpec((H, block_i), lambda b, s, i: (0, i)),         # W_gate tile
                pl.BlockSpec((H, block_i), lambda b, s, i: (0, i)),         # W_up tile
                pl.BlockSpec((block_i, H), lambda b, s, i: (i, 0)),         # W_down tile
            ],
            out_specs=pl.BlockSpec((1, block_s, H), lambda b, s, i: (b, s, 0)),
            scratch_shapes=[pltpu.VMEM((block_s, H), dt),
                            pltpu.VMEM((block_s, H), jnp.float32)],
        ),
        compiler_params=cparams(("parallel", "parallel", "arbitrary")),
    )(attn, x, params["wo"], params["ln2"], params["wg"], params["wu"], params["wd"])
    return out


# ----------------- pure-JAX reference (mirrors the PyTorch forward) -----------------
def ref_decoder_layer(x, params, *, num_heads, head_dim, eps):
    B, S, H = x.shape

    def rmsnorm(h, w):
        hf = h.astype(jnp.float32)
        var = jnp.mean(hf * hf, axis=-1, keepdims=True)
        return w * (hf * lax.rsqrt(var + eps))

    def rot_half(t):
        t1, t2 = t[..., : head_dim // 2], t[..., head_dim // 2:]
        return jnp.concatenate((-t2, t1), axis=-1)

    residual = x
    h = rmsnorm(x, params["ln1"][0])
    q = h @ params["wq"]
    k = h @ params["wk"]
    v = h @ params["wv"]
    q = q.reshape(B, S, num_heads, head_dim).transpose(0, 2, 1, 3)
    k = k.reshape(B, S, num_heads, head_dim).transpose(0, 2, 1, 3)
    v = v.reshape(B, S, num_heads, head_dim).transpose(0, 2, 1, 3)
    cos = params["cos"][None, None]
    sin = params["sin"][None, None]
    q = q * cos + rot_half(q) * sin
    k = k * cos + rot_half(k) * sin
    scores = jnp.einsum("bhqd,bhkd->bhqk", q, k) * head_dim ** (-0.5)
    mask = jnp.where(jnp.triu(jnp.ones((S, S), bool), 1), -jnp.inf, 0.0)
    scores = scores + mask[None, None]
    p = jax.nn.softmax(scores.astype(jnp.float32), axis=-1)
    attn = jnp.einsum("bhqk,bhkd->bhqd", p, v)
    attn = attn.transpose(0, 2, 1, 3).reshape(B, S, H)
    attn = attn @ params["wo"]
    h2 = residual + attn
    hn = rmsnorm(h2, params["ln2"][0])
    g = hn @ params["wg"]
    u = hn @ params["wu"]
    d = (g * jax.nn.sigmoid(g) * u) @ params["wd"]
    return h2 + d


if __name__ == "__main__":
    # small but tiling-exercising shapes (2 seq tiles, 2 KV tiles, 2 I tiles, 2 heads)
    B, S, H = 2, 128, 256
    num_heads, head_dim = 2, 128
    I = 512
    eps = 1e-6

    key = jax.random.PRNGKey(0)
    ks = jax.random.split(key, 10)
    scale = 0.05
    x = jax.random.normal(ks[0], (B, S, H), jnp.float32)

    params = dict(
        ln1=(1.0 + 0.1 * jax.random.normal(ks[1], (1, H), jnp.float32)),
        ln2=(1.0 + 0.1 * jax.random.normal(ks[2], (1, H), jnp.float32)),
        wq=scale * jax.random.normal(ks[3], (H, H), jnp.float32),
        wk=scale * jax.random.normal(ks[4], (H, H), jnp.float32),
        wv=scale * jax.random.normal(ks[5], (H, H), jnp.float32),
        wo=scale * jax.random.normal(ks[6], (H, H), jnp.float32),
        wg=scale * jax.random.normal(ks[7], (H, I), jnp.float32),
        wu=scale * jax.random.normal(ks[8], (H, I), jnp.float32),
        wd=scale * jax.random.normal(ks[9], (I, H), jnp.float32),
    )

    # rotary cos/sin caches (same formula as LlamaRotaryEmbedding)
    inv_freq = 1.0 / (10000.0 ** (jnp.arange(0, head_dim, 2, dtype=jnp.float32) / head_dim))
    t = jnp.arange(S, dtype=jnp.float32)
    freqs = jnp.einsum("i,j->ij", t, inv_freq)
    emb = jnp.concatenate((freqs, freqs), axis=-1)
    params["cos"] = jnp.cos(emb)
    params["sin"] = jnp.sin(emb)

    out = llama_decoder_layer(x, params, num_heads=num_heads, head_dim=head_dim,
                              eps=eps, block_s=64, block_q=64, block_kv=64, block_i=256)
    out = jax.block_until_ready(out)

    ref = ref_decoder_layer(x, params, num_heads=num_heads, head_dim=head_dim, eps=eps)
    max_err = float(jnp.max(jnp.abs(out - ref)))
    assert jnp.allclose(out, ref, atol=2e-4, rtol=2e-4), max_err

    print("KERNEL_OK")
</pallas_src>

<mosaic_0001>
module attributes {stable_mosaic.version = 11 : i64} {
  func.func @ln_qkv_rope_kernel(%arg0: i32, %arg1: i32, %arg2: i32, %arg3: memref<1x64x256xf32, #tpu.memory_space<vmem>>, %arg4: memref<1x256xf32, #tpu.memory_space<vmem>>, %arg5: memref<256x384xf32, #tpu.memory_space<vmem>>, %arg6: memref<64x128xf32, #tpu.memory_space<vmem>>, %arg7: memref<64x128xf32, #tpu.memory_space<vmem>>, %arg8: memref<64x128xf32, #tpu.memory_space<vmem>>, %arg9: memref<64x128xf32, #tpu.memory_space<vmem>>, %arg10: memref<1x64x128xf32, #tpu.memory_space<vmem>>, %arg11: memref<1x64x128xf32, #tpu.memory_space<vmem>>, %arg12: memref<1x64x128xf32, #tpu.memory_space<vmem>>, %arg13: memref<64x256xf32, #tpu.memory_space<vmem>>) attributes {dimension_semantics = [#tpu.dimension_semantics<parallel>, #tpu.dimension_semantics<parallel>, #tpu.dimension_semantics<arbitrary>], iteration_bounds = array<i64: 2, 2, 2>, scalar_prefetch = 0 : i64, scratch_operands = 1 : i64, tpu.core_type = #tpu.core_type<tc>, window_params = [{transform_indices = @transform_0, window_bounds = array<i64: 1, 64, 256>}, {pipeline_mode = #tpu.pipeline_mode<synchronous>, transform_indices = @transform_1, window_bounds = array<i64: 1, 256>}, {transform_indices = @transform_2, window_bounds = array<i64: 256, 384>}, {transform_indices = @transform_3, window_bounds = array<i64: 64, 128>}, {transform_indices = @transform_4, window_bounds = array<i64: 64, 128>}, {transform_indices = @transform_5, window_bounds = array<i64: 64, 128>}, {transform_indices = @transform_6, window_bounds = array<i64: 64, 128>}, {transform_indices = @transform_7, window_bounds = array<i64: 1, 64, 128>}, {transform_indices = @transform_8, window_bounds = array<i64: 1, 64, 128>}, {transform_indices = @transform_9, window_bounds = array<i64: 1, 64, 128>}]} {
    %c0_i32 = arith.constant 0 : i32
    %0 = arith.cmpi eq, %arg2, %c0_i32 : i32
    %1 = arith.extui %0 : i1 to i32
    %c0_i32_0 = arith.constant 0 : i32
    %2 = arith.cmpi ne, %1, %c0_i32_0 : i32
    scf.if %2 {
      %c0_22 = arith.constant 0 : index
      %c0_23 = arith.constant 0 : index
      %c0_24 = arith.constant 0 : index
      %30 = vector.load %arg3[%c0_22, %c0_23, %c0_24] : memref<1x64x256xf32, #tpu.memory_space<vmem>>, vector<1x64x256xf32>
      %31 = vector.shape_cast %30 : vector<1x64x256xf32> to vector<64x256xf32>
      %32 = arith.mulf %31, %31 : vector<64x256xf32>
      %cst_25 = arith.constant dense<0.000000e+00> : vector<64xf32>
      %33 = vector.multi_reduction <add>, %32, %cst_25 [1] : vector<64x256xf32> to vector<64xf32>
      %34 = vector.shape_cast %33 : vector<64xf32> to vector<64x1xf32>
      %cst_26 = arith.constant 2.560000e+02 : f32
      %35 = vector.broadcast %cst_26 : f32 to vector<64x1xf32>
      %36 = arith.divf %34, %35 : vector<64x1xf32>
      %cst_27 = arith.constant 9.99999997E-7 : f32
      %37 = vector.broadcast %cst_27 : f32 to vector<64x1xf32>
      %38 = arith.addf %36, %37 : vector<64x1xf32>
      %39 = math.rsqrt %38 : vector<64x1xf32>
      %40 = vector.broadcast %39 : vector<64x1xf32> to vector<64x256xf32>
      %41 = arith.mulf %31, %40 : vector<64x256xf32>
      %c0_28 = arith.constant 0 : index
      %c0_29 = arith.constant 0 : index
      %42 = vector.load %arg4[%c0_28, %c0_29] : memref<1x256xf32, #tpu.memory_space<vmem>>, vector<1x256xf32>
      %43 = vector.shape_cast %42 : vector<1x256xf32> to vector<256xf32>
      %44 = vector.shape_cast %43 : vector<256xf32> to vector<1x256xf32>
      %45 = vector.broadcast %44 : vector<1x256xf32> to vector<64x256xf32>
      %46 = arith.mulf %41, %45 : vector<64x256xf32>
      %c0_30 = arith.constant 0 : index
      %c0_31 = arith.constant 0 : index
      %47 = vector.load %arg13[%c0_30, %c0_31] : memref<64x256xf32, #tpu.memory_space<vmem>>, vector<64x256xf32>
      tpu.vector_store %arg13[%c0_30, %c0_31], %46 {strides = array<i32>} : memref<64x256xf32, #tpu.memory_space<vmem>>, vector<64x256xf32>,
    } else {
    }
    %c0 = arith.constant 0 : index
    %c0_1 = arith.constant 0 : index
    %3 = vector.load %arg13[%c0, %c0_1] : memref<64x256xf32, #tpu.memory_space<vmem>>, vector<64x256xf32>
    %c0_2 = arith.constant 0 : index
    %c0_3 = arith.constant 0 : index
    %4 = vector.load %arg5[%c0_2, %c0_3] : memref<256x384xf32, #tpu.memory_space<vmem>>, vector<256x384xf32>
    %cst = arith.constant dense<0.000000e+00> : vector<64x384xf32>
    %5 = tpu.matmul %3, %4, %cst {dimension_numbers = #tpu.dot_dimension_numbers<[1], [0], [0], [1], [0, 0, 1, 1], [], []>} : vector<64x256xf32>, vector<256x384xf32>, vector<64x384xf32> -> vector<64x384xf32>
    %6 = vector.extract_strided_slice %5 {offsets = [0, 0], sizes = [64, 128], strides = [1, 1]} : vector<64x384xf32> to vector<64x128xf32>
    %7 = vector.extract_strided_slice %5 {offsets = [0, 128], sizes = [64, 128], strides = [1, 1]} : vector<64x384xf32> to vector<64x128xf32>
    %8 = vector.extract_strided_slice %5 {offsets = [0, 256], sizes = [64, 128], strides = [1, 1]} : vector<64x384xf32> to vector<64x128xf32>
    %c0_4 = arith.constant 0 : index
    %c0_5 = arith.constant 0 : index
    %9 = vector.load %arg6[%c0_4, %c0_5] : memref<64x128xf32, #tpu.memory_space<vmem>>, vector<64x128xf32>
    %10 = arith.mulf %6, %9 : vector<64x128xf32>
    %c64_i32 = arith.constant 64 : i32
    %11 = tpu.dynamic_rotate %6 by %c64_i32 dim 1 : vector<64x128xf32>, i32 -> vector<64x128xf32>
    %c0_6 = arith.constant 0 : index
    %c0_7 = arith.constant 0 : index
    %12 = vector.load %arg7[%c0_6, %c0_7] : memref<64x128xf32, #tpu.memory_space<vmem>>, vector<64x128xf32>
    %13 = arith.mulf %11, %12 : vector<64x128xf32>
    %14 = arith.addf %10, %13 : vector<64x128xf32>
    %c0_8 = arith.constant 0 : index
    %c0_9 = arith.constant 0 : index
    %15 = vector.load %arg8[%c0_8, %c0_9] : memref<64x128xf32, #tpu.memory_space<vmem>>, vector<64x128xf32>
    %16 = arith.mulf %7, %15 : vector<64x128xf32>
    %c64_i32_10 = arith.constant 64 : i32
    %17 = tpu.dynamic_rotate %7 by %c64_i32_10 dim 1 : vector<64x128xf32>, i32 -> vector<64x128xf32>
    %c0_11 = arith.constant 0 : index
    %c0_12 = arith.constant 0 : index
    %18 = vector.load %arg9[%c0_11, %c0_12] : memref<64x128xf32, #tpu.memory_space<vmem>>, vector<64x128xf32>
    %19 = arith.mulf %17, %18 : vector<64x128xf32>
    %20 = arith.addf %16, %19 : vector<64x128xf32>
    %c0_13 = arith.constant 0 : index
    %c0_14 = arith.constant 0 : index
    %c0_15 = arith.constant 0 : index
    %21 = vector.load %arg10[%c0_13, %c0_14, %c0_15] : memref<1x64x128xf32, #tpu.memory_space<vmem>>, vector<1x64x128xf32>
    %22 = vector.shape_cast %21 : vector<1x64x128xf32> to vector<64x128xf32>
    %23 = vector.shape_cast %14 : vector<64x128xf32> to vector<1x64x128xf32>
    tpu.vector_store %arg10[%c0_13, %c0_14, %c0_15], %23 {strides = array<i32>} : memref<1x64x128xf32, #tpu.memory_space<vmem>>, vector<1x64x128xf32>,
    %c0_16 = arith.constant 0 : index
    %c0_17 = arith.constant 0 : index
    %c0_18 = arith.constant 0 : index
    %24 = vector.load %arg11[%c0_16, %c0_17, %c0_18] : memref<1x64x128xf32, #tpu.memory_space<vmem>>, vector<1x64x128xf32>
    %25 = vector.shape_cast %24 : vector<1x64x128xf32> to vector<64x128xf32>
    %26 = vector.shape_cast %20 : vector<64x128xf32> to vector<1x64x128xf32>
    tpu.vector_store %arg11[%c0_16, %c0_17, %c0_18], %26 {strides = array<i32>} : memref<1x64x128xf32, #tpu.memory_space<vmem>>, vector<1x64x128xf32>,
    %c0_19 = arith.constant 0 : index
    %c0_20 = arith.constant 0 : index
    %c0_21 = arith.constant 0 : index
    %27 = vector.load %arg12[%c0_19, %c0_20, %c0_21] : memref<1x64x128xf32, #tpu.memory_space<vmem>>, vector<1x64x128xf32>
    %28 = vector.shape_cast %27 : vector<1x64x128xf32> to vector<64x128xf32>
    %29 = vector.shape_cast %8 : vector<64x128xf32> to vector<1x64x128xf32>
    tpu.vector_store %arg12[%c0_19, %c0_20, %c0_21], %29 {strides = array<i32>} : memref<1x64x128xf32, #tpu.memory_space<vmem>>, vector<1x64x128xf32>,
    return
  }
  func.func @transform_0(%arg0: i32, %arg1: i32, %arg2: i32) -> (i32, i32, i32) {
    %c0_i32 = arith.constant 0 : i32
    %c0_i32_0 = arith.constant 0 : i32
    return %arg0, %arg1, %c0_i32 : i32, i32, i32
  }
  func.func @transform_1(%arg0: i32, %arg1: i32, %arg2: i32) -> (i32, i32) {
    %c0_i32 = arith.constant 0 : i32
    %c0_i32_0 = arith.constant 0 : i32
    %c0_i32_1 = arith.constant 0 : i32
    return %c0_i32, %c0_i32_0 : i32, i32
  }
  func.func @transform_2(%arg0: i32, %arg1: i32, %arg2: i32) -> (i32, i32) {
    %c0_i32 = arith.constant 0 : i32
    %c0_i32_0 = arith.constant 0 : i32
    return %c0_i32, %arg2 : i32, i32
  }
  func.func @transform_3(%arg0: i32, %arg1: i32, %arg2: i32) -> (i32, i32) {
    %c0_i32 = arith.constant 0 : i32
    %c0_i32_0 = arith.constant 0 : i32
    return %arg1, %c0_i32 : i32, i32
  }
  func.func @transform_4(%arg0: i32, %arg1: i32, %arg2: i32) -> (i32, i32) {
    %c0_i32 = arith.constant 0 : i32
    %c0_i32_0 = arith.constant 0 : i32
    return %arg1, %c0_i32 : i32, i32
  }
  func.func @transform_5(%arg0: i32, %arg1: i32, %arg2: i32) -> (i32, i32) {
    %c0_i32 = arith.constant 0 : i32
    %c0_i32_0 = arith.constant 0 : i32
    return %arg1, %c0_i32 : i32, i32
  }
  func.func @transform_6(%arg0: i32, %arg1: i32, %arg2: i32) -> (i32, i32) {
    %c0_i32 = arith.constant 0 : i32
    %c0_i32_0 = arith.constant 0 : i32
    return %arg1, %c0_i32 : i32, i32
  }
  func.func @transform_7(%arg0: i32, %arg1: i32, %arg2: i32) -> (i32, i32, i32) {
    %c0_i32 = arith.constant 0 : i32
    return %arg0, %arg1, %arg2 : i32, i32, i32
  }
  func.func @transform_8(%arg0: i32, %arg1: i32, %arg2: i32) -> (i32, i32, i32) {
    %c0_i32 = arith.constant 0 : i32
    return %arg0, %arg1, %arg2 : i32, i32, i32
  }
  func.func @transform_9(%arg0: i32, %arg1: i32, %arg2: i32) -> (i32, i32, i32) {
    %c0_i32 = arith.constant 0 : i32
    return %arg0, %arg1, %arg2 : i32, i32, i32
  }
}

</mosaic_0001>

<llo_original>
// kernel: tpu_custom_call.1
$region0: #{tpu_custom_call.1}
  #allocation0 [shape = 'u32[]', space=smem, size = 0x4, offset = 0x4, fixed_abs, tag = 'smem constant byte address 0x4 - core index']
  #allocation1 [shape = 'u32[144,128]{1,0:T(1,128)}', space=vmem, size = 0x12000, scoped, tag = 'internal scratch']
  #allocation2 [shape = 'f32[64,256]{1,0:T(8,128)}', space=vmem, size = 0x10000, scoped, tag = 'scratch operand']
  %s0 = inlined_call_operand.hbm [shape: f32[2,128,256], index: 0, kind: input, shape index: {}]
  %s1 = inlined_call_operand.hbm [shape: f32[1,256], index: 1, kind: input, shape index: {}]
  %s2 = inlined_call_operand.hbm [shape: f32[256,768], index: 2, kind: input, shape index: {}]
  %s3 = inlined_call_operand.hbm [shape: f32[128,128], index: 3, kind: input, shape index: {}]
  %s4 = inlined_call_operand.hbm [shape: f32[128,128], index: 4, kind: input, shape index: {}]
  %s5 = inlined_call_operand.hbm [shape: f32[128,128], index: 5, kind: input, shape index: {}]
  %s6 = inlined_call_operand.hbm [shape: f32[128,128], index: 6, kind: input, shape index: {}]
  %s7 = inlined_call_operand.hbm [shape: f32[2,128,256], index: 7, kind: output, shape index: {0}]
  %s8 = inlined_call_operand.hbm [shape: f32[2,128,256], index: 8, kind: output, shape index: {1}]
  %s9 = inlined_call_operand.hbm [shape: f32[2,128,256], index: 9, kind: output, shape index: {2}]
  %10 = xla_tuple %s7, %s8, %s9
  %s11 = sld [smem:[#allocation0]]
  $region109: #{tpu_custom_call.1} parent=0
    _
  %s13 = ssub.s32 1, %s11
  %s14 = scalar_select 0, %s13, %s11
  $region1: #{tpu_custom_call.1} parent=0
    #allocation3 [shape = 'u8[131072]{0}', space=vmem, size = 0x20000, scoped, tag = 'input window, operand 0']
    #allocation4 [shape = 's32[2]{0}', space=sflag, size = 0x8, scoped, tag = 'scoped memory for tpu_custom_call.1']
    #allocation5 [shape = 's32[2]{0}', space=sflag, size = 0x8, scoped, tag = 'scoped memory for tpu_custom_call.1']
    #allocation6 [shape = 'u8[1024]{0}', space=vmem, size = 0x400, scoped, tag = 'input window, operand 1, single buffered']
    #allocation7 [shape = 's32[1]{0}', space=sflag, size = 0x4, scoped, tag = 'scoped memory for tpu_custom_call.1']
    #allocation8 [shape = 'u8[786432]{0}', space=vmem, size = 0xc0000, scoped, tag = 'input window, operand 2']
    #allocation9 [shape = 'u8[65536]{0}', space=vmem, size = 0x10000, scoped, tag = 'input window, operand 3']
    #allocation10 [shape = 'u8[65536]{0}', space=vmem, size = 0x10000, scoped, tag = 'input window, operand 4']
    #allocation11 [shape = 'u8[65536]{0}', space=vmem, size = 0x10000, scoped, tag = 'input window, operand 5']
    #allocation12 [shape = 'u8[65536]{0}', space=vmem, size = 0x10000, scoped, tag = 'input window, operand 6']
    #allocation13 [shape = 'u8[65536]{0}', space=vmem, size = 0x10000, scoped, tag = 'output window, operand 0']
    #allocation14 [shape = 'u8[65536]{0}', space=vmem, size = 0x10000, scoped, tag = 'output window, operand 1']
    #allocation15 [shape = 's32[2]{0}', space=sflag, size = 0x8, scoped, tag = 'scoped memory for tpu_custom_call.1']
    #allocation16 [shape = 'u8[65536]{0}', space=vmem, size = 0x10000, scoped, tag = 'output window, operand 2']
    %15 = vsyncpa [#allocation4], 0
    %s16 = scalar_lea.sflag [#allocation4], 1
    %17 = vsyncpa %s16, 0
    %18 = vsyncpa [#allocation7], 0
    %19 = vsyncpa [#allocation5], 0
    %s20 = scalar_lea.sflag [#allocation5], 1
    %21 = vsyncpa %s20, 0
    %22 = vsyncpa [#allocation15], 0
    %s23 = scalar_lea.sflag [#allocation15], 1
    %24 = vsyncpa %s23, 0
    loop: start=0, step=1, limit=10
    $region2: #{tpu_custom_call.1} parent=1 // loop_pre_header
      _
    $region3: #{tpu_custom_call.1} parent=1 // loop_header
      %s26 = sphi 0, %s30
      %p27 = scmp.ge.s32.totalorder %s26, 10
      %s33 = sphi 0, %s52
      %s34 = sphi 0, %s48
      %s35 = sphi 0, %s44
      %s36 = sphi 0, %s33
      %s37 = sphi 0, %s34
      %s38 = sphi 0, %s35
      %s39 = sphi 0, %s36
      %s40 = sphi 0, %s37
      %s41 = sphi 0, %s38
      %s57 = sphi 0, %s59
      %s60 = sphi 0, %s57
      %s61 = sphi 0, %s60
      %s77 = sphi 0, %s61
      %s81 = sphi 0, %s81
      %s83 = sphi 0, %s81
      %s84 = sphi 0, %s83
      %s98 = sphi 0, %s84
      %s104 = sphi 0, %s106
      %s107 = sphi 0, %s104
      %s108 = sphi 0, %s107
      %s124 = sphi 0, %s108
      %s130 = sphi 0, %s132
      %s133 = sphi 0, %s130
      %s134 = sphi 0, %s133
      %s150 = sphi 0, %s134
      %s156 = sphi 0, %s158
      %s159 = sphi 0, %s156
      %s160 = sphi 0, %s159
      %s176 = sphi 0, %s160
      %s182 = sphi 0, %s184
      %s185 = sphi 0, %s182
      %s186 = sphi 0, %s185
      %s202 = sphi 0, %s186
      %s208 = sphi 0, %s210
      %s211 = sphi 0, %s208
      %s212 = sphi 0, %s211
      %s228 = sphi 0, %s212
      %s238 = sphi 0, %s240
      %s241 = sphi 0, %s238
      %s242 = sphi 0, %s241
      %s258 = sphi 0, %s242
      %s268 = sphi 0, %s270
      %s271 = sphi 0, %s268
      %s272 = sphi 0, %s271
      %s288 = sphi 0, %s272
      %s298 = sphi 0, %s300
      %s301 = sphi 0, %s298
      %s302 = sphi 0, %s301
      %s318 = sphi 0, %s302
    $region4: #{tpu_custom_call.1} parent=1 // loop_header_branch
      %29 = sbr.rel (%p27) target = $region8
    $region5: #{tpu_custom_call.1} parent=1 // loop_body
      %s31 = ssub.s32 %s26, 1
      %s32 = ssub.s32 %s26, 2
      %s42 = sadd.s32 1, %s35
      %p43 = scmp.ge.s32.totalorder %s42, 2
      %s44 = scalar_select %p43, 0, %s42
      %s45 = sadd.s32 1, %s34
      %s46 = scalar_select %p43, %s45, %s34
      %p47 = scmp.ge.s32.totalorder %s46, 2
      %s48 = scalar_select %p47, 0, %s46
      %s49 = sadd.s32 1, %s33
      %s50 = scalar_select %p47, %s49, %s33
      %p51 = scmp.ge.s32.totalorder %s50, 2
      %s52 = scalar_select %p51, 0, %s50
      %s53 = ssub.s32 %s33, %s52
      %s54 = ssub.s32 %s34, %s48
      %s55 = sor.u32 %s53, %s54
      %p56 = scmp.eq.s32.totalorder %s55, 0
      %s58 = sadd.s32 %s57, 1
      %s59 = scalar_select %p56, %s57, %s58
      %p62 = pneg %p56
      %p63 = scmp.eq.s32.totalorder %s26, 7
      %p64 = por %p62, %p63
      %p65 = scmp.ne.s32.totalorder %s57, %s60
      %p66 = scmp.eq.s32.totalorder %s26, 0
      %p67 = por %p65, %p66
      %p68 = scmp.ne.s32.totalorder %s57, %s60
      %p69 = scmp.eq.s32.totalorder %s31, 7
      %p70 = por %p68, %p69
      %p71 = scmp.ne.s32.totalorder %s60, %s61
      %p72 = scmp.eq.s32.totalorder %s31, 0
      %p73 = por %p71, %p72
      %p74 = scmp.ne.s32.totalorder %s60, %s61
      %p75 = scmp.eq.s32.totalorder %s32, 7
      %p76 = por %p74, %p75
      %p78 = scmp.ne.s32.totalorder %s61, %s77
      %p79 = scmp.eq.s32.totalorder %s32, 0
      %p80 = por %p78, %p79
      %s82 = sadd.s32 %s81, 1
      %p85 = scmp.eq.s32.totalorder %s26, 7
      %p86 = scmp.ne.s32.totalorder %s81, %s83
      %p87 = scmp.eq.s32.totalorder %s26, 0
      %p88 = por %p86, %p87
      %p89 = scmp.ne.s32.totalorder %s81, %s83
      %p90 = scmp.eq.s32.totalorder %s31, 7
      %p91 = por %p89, %p90
      %p92 = scmp.ne.s32.totalorder %s83, %s84
      %p93 = scmp.eq.s32.totalorder %s31, 0
      %p94 = por %p92, %p93
      %p95 = scmp.ne.s32.totalorder %s83, %s84
      %p96 = scmp.eq.s32.totalorder %s32, 7
      %p97 = por %p95, %p96
      %p99 = scmp.ne.s32.totalorder %s84, %s98
      %p100 = scmp.eq.s32.totalorder %s32, 0
      %p101 = por %p99, %p100
      %s102 = ssub.s32 %s35, %s44
      %p103 = scmp.eq.s32.totalorder %s102, 0
      %s105 = sadd.s32 %s104, 1
      %s106 = scalar_select %p103, %s104, %s105
      %p109 = pneg %p103
      %p110 = scmp.eq.s32.totalorder %s26, 7
      %p111 = por %p109, %p110
      %p112 = scmp.ne.s32.totalorder %s104, %s107
      %p113 = scmp.eq.s32.totalorder %s26, 0
      %p114 = por %p112, %p113
      %p115 = scmp.ne.s32.totalorder %s104, %s107
      %p116 = scmp.eq.s32.totalorder %s31, 7
      %p117 = por %p115, %p116
      %p118 = scmp.ne.s32.totalorder %s107, %s108
      %p119 = scmp.eq.s32.totalorder %s31, 0
      %p120 = por %p118, %p119
      %p121 = scmp.ne.s32.totalorder %s107, %s108
      %p122 = scmp.eq.s32.totalorder %s32, 7
      %p123 = por %p121, %p122
      %p125 = scmp.ne.s32.totalorder %s108, %s124
      %p126 = scmp.eq.s32.totalorder %s32, 0
      %p127 = por %p125, %p126
      %s128 = ssub.s32 %s34, %s48
      %p129 = scmp.eq.s32.totalorder %s128, 0
      %s131 = sadd.s32 %s130, 1
      %s132 = scalar_select %p129, %s130, %s131
      %p135 = pneg %p129
      %p136 = scmp.eq.s32.totalorder %s26, 7
      %p137 = por %p135, %p136
      %p138 = scmp.ne.s32.totalorder %s130, %s133
      %p139 = scmp.eq.s32.totalorder %s26, 0
      %p140 = por %p138, %p139
      %p141 = scmp.ne.s32.totalorder %s130, %s133
      %p142 = scmp.eq.s32.totalorder %s31, 7
      %p143 = por %p141, %p142
      %p144 = scmp.ne.s32.totalorder %s133, %s134
      %p145 = scmp.eq.s32.totalorder %s31, 0
      %p146 = por %p144, %p145
      %p147 = scmp.ne.s32.totalorder %s133, %s134
      %p148 = scmp.eq.s32.totalorder %s32, 7
      %p149 = por %p147, %p148
      %p151 = scmp.ne.s32.totalorder %s134, %s150
      %p152 = scmp.eq.s32.totalorder %s32, 0
      %p153 = por %p151, %p152
      %s154 = ssub.s32 %s34, %s48
      %p155 = scmp.eq.s32.totalorder %s154, 0
      %s157 = sadd.s32 %s156, 1
      %s158 = scalar_select %p155, %s156, %s157
      %p161 = pneg %p155
      %p162 = scmp.eq.s32.totalorder %s26, 7
      %p163 = por %p161, %p162
      %p164 = scmp.ne.s32.totalorder %s156, %s159
      %p165 = scmp.eq.s32.totalorder %s26, 0
      %p166 = por %p164, %p165
      %p167 = scmp.ne.s32.totalorder %s156, %s159
      %p168 = scmp.eq.s32.totalorder %s31, 7
      %p169 = por %p167, %p168
      %p170 = scmp.ne.s32.totalorder %s159, %s160
      %p171 = scmp.eq.s32.totalorder %s31, 0
      %p172 = por %p170, %p171
      %p173 = scmp.ne.s32.totalorder %s159, %s160
      %p174 = scmp.eq.s32.totalorder %s32, 7
      %p175 = por %p173, %p174
      %p177 = scmp.ne.s32.totalorder %s160, %s176
      %p178 = scmp.eq.s32.totalorder %s32, 0
      %p179 = por %p177, %p178
      %s180 = ssub.s32 %s34, %s48
      %p181 = scmp.eq.s32.totalorder %s180, 0
      %s183 = sadd.s32 %s182, 1
      %s184 = scalar_select %p181, %s182, %s183
      %p187 = pneg %p181
      %p188 = scmp.eq.s32.totalorder %s26, 7
      %p189 = por %p187, %p188
      %p190 = scmp.ne.s32.totalorder %s182, %s185
      %p191 = scmp.eq.s32.totalorder %s26, 0
      %p192 = por %p190, %p191
      %p193 = scmp.ne.s32.totalorder %s182, %s185
      %p194 = scmp.eq.s32.totalorder %s31, 7
      %p195 = por %p193, %p194
      %p196 = scmp.ne.s32.totalorder %s185, %s186
      %p197 = scmp.eq.s32.totalorder %s31, 0
      %p198 = por %p196, %p197
      %p199 = scmp.ne.s32.totalorder %s185, %s186
      %p200 = scmp.eq.s32.totalorder %s32, 7
      %p201 = por %p199, %p200
      %p203 = scmp.ne.s32.totalorder %s186, %s202
      %p204 = scmp.eq.s32.totalorder %s32, 0
      %p205 = por %p203, %p204
      %s206 = ssub.s32 %s34, %s48
      %p207 = scmp.eq.s32.totalorder %s206, 0
      %s209 = sadd.s32 %s208, 1
      %s210 = scalar_select %p207, %s208, %s209
      %p213 = pneg %p207
      %p214 = scmp.eq.s32.totalorder %s26, 7
      %p215 = por %p213, %p214
      %p216 = scmp.ne.s32.totalorder %s208, %s211
      %p217 = scmp.eq.s32.totalorder %s26, 0
      %p218 = por %p216, %p217
      %p219 = scmp.ne.s32.totalorder %s208, %s211
      %p220 = scmp.eq.s32.totalorder %s31, 7
      %p221 = por %p219, %p220
      %p222 = scmp.ne.s32.totalorder %s211, %s212
      %p223 = scmp.eq.s32.totalorder %s31, 0
      %p224 = por %p222, %p223
      %p225 = scmp.ne.s32.totalorder %s211, %s212
      %p226 = scmp.eq.s32.totalorder %s32, 7
      %p227 = por %p225, %p226
      %p229 = scmp.ne.s32.totalorder %s212, %s228
      %p230 = scmp.eq.s32.totalorder %s32, 0
      %p231 = por %p229, %p230
      %s232 = ssub.s32 %s33, %s52
      %s233 = ssub.s32 %s34, %s48
      %s234 = sor.u32 %s232, %s233
      %s235 = ssub.s32 %s35, %s44
      %s236 = sor.u32 %s234, %s235
      %p237 = scmp.eq.s32.totalorder %s236, 0
      %s239 = sadd.s32 %s238, 1
      %s240 = scalar_select %p237, %s238, %s239
      %p243 = pneg %p237
      %p244 = scmp.eq.s32.totalorder %s26, 7
      %p245 = por %p243, %p244
      %p246 = scmp.ne.s32.totalorder %s238, %s241
      %p247 = scmp.eq.s32.totalorder %s26, 0
      %p248 = por %p246, %p247
      %p249 = scmp.ne.s32.totalorder %s238, %s241
      %p250 = scmp.eq.s32.totalorder %s31, 7
      %p251 = por %p249, %p250
      %p252 = scmp.ne.s32.totalorder %s241, %s242
      %p253 = scmp.eq.s32.totalorder %s31, 0
      %p254 = por %p252, %p253
      %p255 = scmp.ne.s32.totalorder %s241, %s242
      %p256 = scmp.eq.s32.totalorder %s32, 7
      %p257 = por %p255, %p256
      %p259 = scmp.ne.s32.totalorder %s242, %s258
      %p260 = scmp.eq.s32.totalorder %s32, 0
      %p261 = por %p259, %p260
      %s262 = ssub.s32 %s33, %s52
      %s263 = ssub.s32 %s34, %s48
      %s264 = sor.u32 %s262, %s263
      %s265 = ssub.s32 %s35, %s44
      %s266 = sor.u32 %s264, %s265
      %p267 = scmp.eq.s32.totalorder %s266, 0
      %s269 = sadd.s32 %s268, 1
      %s270 = scalar_select %p267, %s268, %s269
      %p273 = pneg %p267
      %p274 = scmp.eq.s32.totalorder %s26, 7
      %p275 = por %p273, %p274
      %p276 = scmp.ne.s32.totalorder %s268, %s271
      %p277 = scmp.eq.s32.totalorder %s26, 0
      %p278 = por %p276, %p277
      %p279 = scmp.ne.s32.totalorder %s268, %s271
      %p280 = scmp.eq.s32.totalorder %s31, 7
      %p281 = por %p279, %p280
      %p282 = scmp.ne.s32.totalorder %s271, %s272
      %p283 = scmp.eq.s32.totalorder %s31, 0
      %p284 = por %p282, %p283
      %p285 = scmp.ne.s32.totalorder %s271, %s272
      %p286 = scmp.eq.s32.totalorder %s32, 7
      %p287 = por %p285, %p286
      %p289 = scmp.ne.s32.totalorder %s272, %s288
      %p290 = scmp.eq.s32.totalorder %s32, 0
      %p291 = por %p289, %p290
      %s292 = ssub.s32 %s33, %s52
      %s293 = ssub.s32 %s34, %s48
      %s294 = sor.u32 %s292, %s293
      %s295 = ssub.s32 %s35, %s44
      %s296 = sor.u32 %s294, %s295
      %p297 = scmp.eq.s32.totalorder %s296, 0
      %s299 = sadd.s32 %s298, 1
      %s300 = scalar_select %p297, %s298, %s299
      %p303 = pneg %p297
      %p304 = scmp.eq.s32.totalorder %s26, 7
      %p305 = por %p303, %p304
      %p306 = scmp.ne.s32.totalorder %s298, %s301
      %p307 = scmp.eq.s32.totalorder %s26, 0
      %p308 = por %p306, %p307
      %p309 = scmp.ne.s32.totalorder %s298, %s301
      %p310 = scmp.eq.s32.totalorder %s31, 7
      %p311 = por %p309, %p310
      %p312 = scmp.ne.s32.totalorder %s301, %s302
      %p313 = scmp.eq.s32.totalorder %s31, 0
      %p314 = por %p312, %p313
      %p315 = scmp.ne.s32.totalorder %s301, %s302
      %p316 = scmp.eq.s32.totalorder %s32, 7
      %p317 = por %p315, %p316
      %p319 = scmp.ne.s32.totalorder %s302, %s318
      %p320 = scmp.eq.s32.totalorder %s32, 0
      %p321 = por %p319, %p320
      %p322 = scmp.le.s32.totalorder 1, %s26
      %p323 = scmp.lt.s32.totalorder %s26, 9
      %p324 = pnand %p322, %p323
      %p325 = pneg %p324
      // Predicated region
      $region9: #{tpu_custom_call.1} parent=5 // pred_check
        _
      $region10: #{tpu_custom_call.1} parent=5 // pred_check_branch
        %327 = sbr.rel (%p324) target = $region12
      $region11: #{tpu_custom_call.1} parent=5 // pred_region
        %s328 = ssub.s32 %s26, 1
        // Predicated region
        $region13: #{tpu_custom_call.1} parent=11 // pred_check
          %p329 = pneg %p94
        $region14: #{tpu_custom_call.1} parent=11 // pred_check_branch
          %331 = sbr.rel (%p329) target = $region16
        $region15: #{tpu_custom_call.1} parent=11 // pred_region
          %s333 = ssub.s32 32, 32
          %334 = vsyncadd [#allocation7], %s333
          %s336 = sshll.u32 [#allocation6], 4
          %s337 = int_to_ptr.vmem [resolvable:$true] %s336
          %339 = dma.hbm_to_vmem [thread:$0]  %s1, 32, %s337, [#allocation7]
        $region16: #{tpu_custom_call.1} parent=11 // pred_fallthru
          _
      $region12: #{tpu_custom_call.1} parent=5 // pred_fallthru
        _
      %p340 = scmp.lt.s32.totalorder %s26, 8
      // Predicated region
      $region17: #{tpu_custom_call.1} parent=5 // pred_check
        %p341 = pneg %p340
      $region18: #{tpu_custom_call.1} parent=5 // pred_check_branch
        %343 = sbr.rel (%p341) target = $region20
      $region19: #{tpu_custom_call.1} parent=5 // pred_region
        // Predicated region
        $region21: #{tpu_custom_call.1} parent=19 // pred_check
          %p344 = pneg %p67
        $region22: #{tpu_custom_call.1} parent=19 // pred_check_branch
          %346 = sbr.rel (%p344) target = $region24
        $region23: #{tpu_custom_call.1} parent=19 // pred_region
          %s347 = sand.u32 %s26, 1
          %s348 = scalar_lea.sflag [#allocation4], %s347
          %s349 = sand.u32 %s57, 1
          %s350 = smul.addr %s349, 128
          %s351 = scalar_lea.vmem [#allocation3], %s350
          %s352 = smul.u32 8, %s34
          %s354 = ssub.s32 2048, 2048
          %355 = vsyncadd %s348, %s354
          %s356 = smul.addr %s352, 2
          %s357 = smul.addr %s33, 32
          %s358 = sadd.s32 %s356, %s357
          %s359 = smul.addr %s358, 128
          %s360 = scalar_lea.hbm %s0, %s359
          %s361 = sshll.u32 %s351, 4
          %s362 = int_to_ptr.vmem [resolvable:$true] %s361
          %367 = dma.hbm_to_vmem [thread:$0]  %s360, 2048, %s362, %s348, 256, 256, 16
        $region24: #{tpu_custom_call.1} parent=19 // pred_fallthru
          _
        // Predicated region
        $region25: #{tpu_custom_call.1} parent=19 // pred_check
          %p368 = pneg %p114
        $region26: #{tpu_custom_call.1} parent=19 // pred_check_branch
          %370 = sbr.rel (%p368) target = $region28
        $region27: #{tpu_custom_call.1} parent=19 // pred_region
          %s371 = sand.u32 %s26, 1
          %s372 = scalar_lea.sflag [#allocation4], %s371
          %s373 = sand.u32 %s104, 1
          %s374 = smul.addr %s373, 768
          %s375 = scalar_lea.vmem [#allocation8], %s374
          %s376 = smul.u32 3, %s35
          %s378 = ssub.s32 12288, 12288
          %379 = vsyncadd %s372, %s378
          %s380 = smul.addr %s376, 128
          %s381 = scalar_lea.hbm %s2, %s380
          %s382 = sshll.u32 %s375, 4
          %s383 = int_to_ptr.vmem [resolvable:$true] %s382
          %388 = dma.hbm_to_vmem [thread:$0]  %s381, 12288, %s383, %s372, 768, 384, 24
        $region28: #{tpu_custom_call.1} parent=19 // pred_fallthru
          _
        // Predicated region
        $region29: #{tpu_custom_call.1} parent=19 // pred_check
          %p389 = pneg %p140
        $region30: #{tpu_custom_call.1} parent=19 // pred_check_branch
          %391 = sbr.rel (%p389) target = $region32
        $region31: #{tpu_custom_call.1} parent=19 // pred_region
          %s392 = sand.u32 %s26, 1
          %s393 = scalar_lea.sflag [#allocation4], %s392
          %s394 = sand.u32 %s130, 1
          %s395 = smul.addr %s394, 64
          %s396 = scalar_lea.vmem [#allocation9], %s395
          %s397 = smul.u32 8, %s34
          %s399 = ssub.s32 1024, 1024
          %400 = vsyncadd %s393, %s399
          %s401 = smul.addr %s397, 128
          %s402 = scalar_lea.hbm %s3, %s401
          %s403 = sshll.u32 %s396, 4
          %s404 = int_to_ptr.vmem [resolvable:$true] %s403
          %409 = dma.hbm_to_vmem [thread:$0]  %s402, 1024, %s404, %s393, 128, 128, 8
        $region32: #{tpu_custom_call.1} parent=19 // pred_fallthru
          _
        // Predicated region
        $region33: #{tpu_custom_call.1} parent=19 // pred_check
          %p410 = pneg %p166
        $region34: #{tpu_custom_call.1} parent=19 // pred_check_branch
          %412 = sbr.rel (%p410) target = $region36
        $region35: #{tpu_custom_call.1} parent=19 // pred_region
          %s413 = sand.u32 %s26, 1
          %s414 = scalar_lea.sflag [#allocation4], %s413
          %s415 = sand.u32 %s156, 1
          %s416 = smul.addr %s415, 64
          %s417 = scalar_lea.vmem [#allocation10], %s416
          %s418 = smul.u32 8, %s34
          %s420 = ssub.s32 1024, 1024
          %421 = vsyncadd %s414, %s420
          %s422 = smul.addr %s418, 128
          %s423 = scalar_lea.hbm %s4, %s422
          %s424 = sshll.u32 %s417, 4
          %s425 = int_to_ptr.vmem [resolvable:$true] %s424
          %430 = dma.hbm_to_vmem [thread:$0]  %s423, 1024, %s425, %s414, 128, 128, 8
        $region36: #{tpu_custom_call.1} parent=19 // pred_fallthru
          _
        // Predicated region
        $region37: #{tpu_custom_call.1} parent=19 // pred_check
          %p431 = pneg %p192
        $region38: #{tpu_custom_call.1} parent=19 // pred_check_branch
          %433 = sbr.rel (%p431) target = $region40
        $region39: #{tpu_custom_call.1} parent=19 // pred_region
          %s434 = sand.u32 %s26, 1
          %s435 = scalar_lea.sflag [#allocation4], %s434
          %s436 = sand.u32 %s182, 1
          %s437 = smul.addr %s436, 64
          %s438 = scalar_lea.vmem [#allocation11], %s437
          %s439 = smul.u32 8, %s34
          %s441 = ssub.s32 1024, 1024
          %442 = vsyncadd %s435, %s441
          %s443 = smul.addr %s439, 128
          %s444 = scalar_lea.hbm %s5, %s443
          %s445 = sshll.u32 %s438, 4
          %s446 = int_to_ptr.vmem [resolvable:$true] %s445
          %451 = dma.hbm_to_vmem [thread:$0]  %s444, 1024, %s446, %s435, 128, 128, 8
        $region40: #{tpu_custom_call.1} parent=19 // pred_fallthru
          _
        // Predicated region
        $region41: #{tpu_custom_call.1} parent=19 // pred_check
          %p452 = pneg %p218
        $region42: #{tpu_custom_call.1} parent=19 // pred_check_branch
          %454 = sbr.rel (%p452) target = $region44
        $region43: #{tpu_custom_call.1} parent=19 // pred_region
          %s455 = sand.u32 %s26, 1
          %s456 = scalar_lea.sflag [#allocation4], %s455
          %s457 = sand.u32 %s208, 1
          %s458 = smul.addr %s457, 64
          %s459 = scalar_lea.vmem [#allocation12], %s458
          %s460 = smul.u32 8, %s34
          %s462 = ssub.s32 1024, 1024
          %463 = vsyncadd %s456, %s462
          %s464 = smul.addr %s460, 128
          %s465 = scalar_lea.hbm %s6, %s464
          %s466 = sshll.u32 %s459, 4
          %s467 = int_to_ptr.vmem [resolvable:$true] %s466
          %472 = dma.hbm_to_vmem [thread:$0]  %s465, 1024, %s467, %s456, 128, 128, 8
        $region44: #{tpu_custom_call.1} parent=19 // pred_fallthru
          _
      $region20: #{tpu_custom_call.1} parent=5 // pred_fallthru
        _
      %p473 = scmp.le.s32.totalorder 1, %s26
      %p474 = scmp.lt.s32.totalorder %s26, 9
      %p475 = pnand %p473, %p474
      %p476 = pneg %p475
      // Predicated region
      $region45: #{tpu_custom_call.1} parent=5 // pred_check
        _
      $region46: #{tpu_custom_call.1} parent=5 // pred_check_branch
        %478 = sbr.rel (%p475) target = $region48
      $region47: #{tpu_custom_call.1} parent=5 // pred_region
        %s479 = ssub.s32 %s26, 1
        %s480 = sand.u32 %s31, 1
        %s481 = scalar_lea.sflag [#allocation4], %s480
        %s482 = sand.u32 %s60, 1
        %s483 = smul.addr %s482, 128
        %s484 = scalar_lea.vmem [#allocation3], %s483
        // Predicated region
        $region49: #{tpu_custom_call.1} parent=47 // pred_check
          %p485 = pneg %p73
        $region50: #{tpu_custom_call.1} parent=47 // pred_check_branch
          %487 = sbr.rel (%p485) target = $region52
        $region51: #{tpu_custom_call.1} parent=47 // pred_region
          %488 = dma.done %s481, 2048
        $region52: #{tpu_custom_call.1} parent=47 // pred_fallthru
          _
        // Predicated region
        $region53: #{tpu_custom_call.1} parent=47 // pred_check
          %p489 = pneg %p94
        $region54: #{tpu_custom_call.1} parent=47 // pred_check_branch
          %491 = sbr.rel (%p489) target = $region56
        $region55: #{tpu_custom_call.1} parent=47 // pred_region
          %492 = dma.done [#allocation7], 32
        $region56: #{tpu_custom_call.1} parent=47 // pred_fallthru
          _
        %s493 = sand.u32 %s31, 1
        %s494 = scalar_lea.sflag [#allocation4], %s493
        %s495 = sand.u32 %s107, 1
        %s496 = smul.addr %s495, 768
        %s497 = scalar_lea.vmem [#allocation8], %s496
        // Predicated region
        $region57: #{tpu_custom_call.1} parent=47 // pred_check
          %p498 = pneg %p120
        $region58: #{tpu_custom_call.1} parent=47 // pred_check_branch
          %500 = sbr.rel (%p498) target = $region60
        $region59: #{tpu_custom_call.1} parent=47 // pred_region
          %501 = dma.done %s494, 12288
        $region60: #{tpu_custom_call.1} parent=47 // pred_fallthru
          _
        %s502 = sand.u32 %s31, 1
        %s503 = scalar_lea.sflag [#allocation4], %s502
        %s504 = sand.u32 %s133, 1
        %s505 = smul.addr %s504, 64
        %s506 = scalar_lea.vmem [#allocation9], %s505
        // Predicated region
        $region61: #{tpu_custom_call.1} parent=47 // pred_check
          %p507 = pneg %p146
        $region62: #{tpu_custom_call.1} parent=47 // pred_check_branch
          %509 = sbr.rel (%p507) target = $region64
        $region63: #{tpu_custom_call.1} parent=47 // pred_region
          %510 = dma.done %s503, 1024
        $region64: #{tpu_custom_call.1} parent=47 // pred_fallthru
          _
        %s511 = sand.u32 %s31, 1
        %s512 = scalar_lea.sflag [#allocation4], %s511
        %s513 = sand.u32 %s159, 1
        %s514 = smul.addr %s513, 64
        %s515 = scalar_lea.vmem [#allocation10], %s514
        // Predicated region
        $region65: #{tpu_custom_call.1} parent=47 // pred_check
          %p516 = pneg %p172
        $region66: #{tpu_custom_call.1} parent=47 // pred_check_branch
          %518 = sbr.rel (%p516) target = $region68
        $region67: #{tpu_custom_call.1} parent=47 // pred_region
          %519 = dma.done %s512, 1024
        $region68: #{tpu_custom_call.1} parent=47 // pred_fallthru
          _
        %s520 = sand.u32 %s31, 1
        %s521 = scalar_lea.sflag [#allocation4], %s520
        %s522 = sand.u32 %s185, 1
        %s523 = smul.addr %s522, 64
        %s524 = scalar_lea.vmem [#allocation11], %s523
        // Predicated region
        $region69: #{tpu_custom_call.1} parent=47 // pred_check
          %p525 = pneg %p198
        $region70: #{tpu_custom_call.1} parent=47 // pred_check_branch
          %527 = sbr.rel (%p525) target = $region72
        $region71: #{tpu_custom_call.1} parent=47 // pred_region
          %528 = dma.done %s521, 1024
        $region72: #{tpu_custom_call.1} parent=47 // pred_fallthru
          _
        %s529 = sand.u32 %s31, 1
        %s530 = scalar_lea.sflag [#allocation4], %s529
        %s531 = sand.u32 %s211, 1
        %s532 = smul.addr %s531, 64
        %s533 = scalar_lea.vmem [#allocation12], %s532
        // Predicated region
        $region73: #{tpu_custom_call.1} parent=47 // pred_check
          %p534 = pneg %p224
        $region74: #{tpu_custom_call.1} parent=47 // pred_check_branch
          %536 = sbr.rel (%p534) target = $region76
        $region75: #{tpu_custom_call.1} parent=47 // pred_region
          %537 = dma.done %s530, 1024
        $region76: #{tpu_custom_call.1} parent=47 // pred_fallthru
          _
        %s538 = sand.u32 %s31, 1
        %s539 = scalar_lea.sflag [#allocation4], %s538
        %s540 = sand.u32 %s60, 1
        %s541 = smul.addr %s540, 128
        %s542 = scalar_lea.vmem [#allocation3], %s541
        %p543 = pneg %p73
        %p544 = pneg %p70
        %p545 = pneg %p94
        %p546 = pneg %p91
        %s547 = sand.u32 %s31, 1
        %s548 = scalar_lea.sflag [#allocation4], %s547
        %s549 = sand.u32 %s107, 1
        %s550 = smul.addr %s549, 768
        %s551 = scalar_lea.vmem [#allocation8], %s550
        %p552 = pneg %p120
        %p553 = pneg %p117
        %s554 = sand.u32 %s31, 1
        %s555 = scalar_lea.sflag [#allocation4], %s554
        %s556 = sand.u32 %s133, 1
        %s557 = smul.addr %s556, 64
        %s558 = scalar_lea.vmem [#allocation9], %s557
        %p559 = pneg %p146
        %p560 = pneg %p143
        %s561 = sand.u32 %s31, 1
        %s562 = scalar_lea.sflag [#allocation4], %s561
        %s563 = sand.u32 %s159, 1
        %s564 = smul.addr %s563, 64
        %s565 = scalar_lea.vmem [#allocation10], %s564
        %p566 = pneg %p172
        %p567 = pneg %p169
        %s568 = sand.u32 %s31, 1
        %s569 = scalar_lea.sflag [#allocation4], %s568
        %s570 = sand.u32 %s185, 1
        %s571 = smul.addr %s570, 64
        %s572 = scalar_lea.vmem [#allocation11], %s571
        %p573 = pneg %p198
        %p574 = pneg %p195
        %s575 = sand.u32 %s31, 1
        %s576 = scalar_lea.sflag [#allocation4], %s575
        %s577 = sand.u32 %s211, 1
        %s578 = smul.addr %s577, 64
        %s579 = scalar_lea.vmem [#allocation12], %s578
        %p580 = pneg %p224
        %p581 = pneg %p221
        %p582 = pneg %p254
        %p583 = pneg %p251
        %s584 = sand.u32 %s241, 1
        %s585 = scalar_lea.sflag [#allocation5], %s584
        %s586 = sand.u32 %s241, 1
        %s587 = smul.addr %s586, 64
        %s588 = scalar_lea.vmem [#allocation13], %s587
        %p589 = pneg %p284
        %p590 = pneg %p281
        %s591 = sand.u32 %s31, 1
        %s592 = scalar_lea.sflag [#allocation15], %s591
        %s593 = sand.u32 %s271, 1
        %s594 = smul.addr %s593, 64
        %s595 = scalar_lea.vmem [#allocation14], %s594
        %p596 = pneg %p314
        %p597 = pneg %p311
        %s598 = sand.u32 %s31, 1
        %s599 = scalar_lea.sflag [#allocation15], %s598
        %s600 = sand.u32 %s301, 1
        %s601 = smul.addr %s600, 64
        %s602 = scalar_lea.vmem [#allocation16], %s601
        %s603 = smul.u32 8, %s37
        %s604 = smul.u32 3, %s38
        %s605 = smul.u32 8, %s37
        %s606 = smul.u32 8, %s37
        %s607 = smul.u32 8, %s37
        %s608 = smul.u32 8, %s37
        %s609 = smul.u32 8, %s37
        %s610 = smul.u32 8, %s37
        %s611 = smul.u32 8, %s37
        %p612 = scmp.eq.s32.totalorder %s38, 0
        // Predicated region
        $region77: #{tpu_custom_call.1} parent=47 // pred_check
          %p613 = pneg %p612
        $region78: #{tpu_custom_call.1} parent=47 // pred_check_branch
          %615 = sbr.rel (%p613) target = $region80
        $region79: #{tpu_custom_call.1} parent=47 // pred_region
          %v616 = vld [vmem:[%s484] sm:$0xff]
          %v617 = vld [vmem:[%s484 + $0x8] sm:$0xff]
          %v618 = vld [vmem:[%s484 + $0x10] sm:$0xff]
          %v619 = vld [vmem:[%s484 + $0x18] sm:$0xff]
          %v620 = vld [vmem:[%s484 + $0x20] sm:$0xff]
          %v621 = vld [vmem:[%s484 + $0x28] sm:$0xff]
          %v622 = vld [vmem:[%s484 + $0x30] sm:$0xff]
          %v623 = vld [vmem:[%s484 + $0x38] sm:$0xff]
          %v624 = vld [vmem:[%s484 + $0x40] sm:$0xff]
          %v625 = vld [vmem:[%s484 + $0x48] sm:$0xff]
          %v626 = vld [vmem:[%s484 + $0x50] sm:$0xff]
          %v627 = vld [vmem:[%s484 + $0x58] sm:$0xff]
          %v628 = vld [vmem:[%s484 + $0x60] sm:$0xff]
          %v629 = vld [vmem:[%s484 + $0x68] sm:$0xff]
          %v630 = vld [vmem:[%s484 + $0x70] sm:$0xff]
          %v631 = vld [vmem:[%s484 + $0x78] sm:$0xff]
          %v632 = vmul.f32 %v616, %v616
          %v633 = vmul.f32 %v617, %v617
          %v634 = vmul.f32 %v618, %v618
          %v635 = vmul.f32 %v619, %v619
          %v636 = vmul.f32 %v620, %v620
          %v637 = vmul.f32 %v621, %v621
          %v638 = vmul.f32 %v622, %v622
          %v639 = vmul.f32 %v623, %v623
          %v640 = vmul.f32 %v624, %v624
          %v641 = vmul.f32 %v625, %v625
          %v642 = vmul.f32 %v626, %v626
          %v643 = vmul.f32 %v627, %v627
          %v644 = vmul.f32 %v628, %v628
          %v645 = vmul.f32 %v629, %v629
          %v646 = vmul.f32 %v630, %v630
          %v647 = vmul.f32 %v631, %v631
          %v648 = vadd.f32 %v632, %v633
          %649 = vadd.xlane.f32.xlu0 %v648
          %v650 = vpop.xlane.xlu0 %649
          %v651 = vadd.f32 %v634, %v635
          %652 = vadd.xlane.f32.xlu0 %v651
          %v653 = vpop.xlane.xlu0 %652
          %v654 = vadd.f32 %v636, %v637
          %655 = vadd.xlane.f32.xlu0 %v654
          %v656 = vpop.xlane.xlu0 %655
          %v657 = vadd.f32 %v638, %v639
          %658 = vadd.xlane.f32.xlu0 %v657
          %v659 = vpop.xlane.xlu0 %658
          %v660 = vadd.f32 %v640, %v641
          %661 = vadd.xlane.f32.xlu0 %v660
          %v662 = vpop.xlane.xlu0 %661
          %v663 = vadd.f32 %v642, %v643
          %664 = vadd.xlane.f32.xlu0 %v663
          %v665 = vpop.xlane.xlu0 %664
          %v666 = vadd.f32 %v644, %v645
          %667 = vadd.xlane.f32.xlu0 %v666
          %v668 = vpop.xlane.xlu0 %667
          %v669 = vadd.f32 %v646, %v647
          %670 = vadd.xlane.f32.xlu0 %v669
          %v671 = vpop.xlane.xlu0 %670
          %v672 = vrcp.pop 256.0
          %v673 = vmul.f32 %v650, %v672
          %v674 = vmul.f32 %v653, %v672
          %v675 = vmul.f32 %v656, %v672
          %v676 = vmul.f32 %v659, %v672
          %v677 = vmul.f32 %v662, %v672
          %v678 = vmul.f32 %v665, %v672
          %v679 = vmul.f32 %v668, %v672
          %v680 = vmul.f32 %v671, %v672
          %v681 = vadd.f32 %v673, 1e-06
          %v682 = vadd.f32 %v674, 1e-06
          %v683 = vadd.f32 %v675, 1e-06
          %v684 = vadd.f32 %v676, 1e-06
          %v685 = vadd.f32 %v677, 1e-06
          %v686 = vadd.f32 %v678, 1e-06
          %v687 = vadd.f32 %v679, 1e-06
          %v688 = vadd.f32 %v680, 1e-06
          %v689 = vrsqrt.pop %v681
          %v690 = vrsqrt.pop %v682
          %v691 = vrsqrt.pop %v683
          %v692 = vrsqrt.pop %v684
          %v693 = vrsqrt.pop %v685
          %v694 = vrsqrt.pop %v686
          %v695 = vrsqrt.pop %v687
          %v696 = vrsqrt.pop %v688
          %v697 = vmul.f32 %v616, %v689
          %v698 = vmul.f32 %v617, %v689
          %v699 = vmul.f32 %v618, %v690
          %v700 = vmul.f32 %v619, %v690
          %v701 = vmul.f32 %v620, %v691
          %v702 = vmul.f32 %v621, %v691
          %v703 = vmul.f32 %v622, %v692
          %v704 = vmul.f32 %v623, %v692
          %v705 = vmul.f32 %v624, %v693
          %v706 = vmul.f32 %v625, %v693
          %v707 = vmul.f32 %v626, %v694
          %v708 = vmul.f32 %v627, %v694
          %v709 = vmul.f32 %v628, %v695
          %v710 = vmul.f32 %v629, %v695
          %v711 = vmul.f32 %v630, %v696
          %v712 = vmul.f32 %v631, %v696
          %v713 = vld [vmem:[#allocation6] sm:$0x3]
          %v715 = vlaneseq
          %v716 = vshrl.u32 %v715, 7
          %v717 = vsub.s32 0, %v716
          %v718 = vrot.slane %v713, %v717
          %v719 = vlaneseq
          %v720 = vshrl.u32 %v719, 7
          %v721 = vsub.s32 1, %v720
          %v722 = vrot.slane %v713, %v721
          %v725 = vmul.f32 %v697, %v718
          %v726 = vmul.f32 %v698, %v722
          %v727 = vmul.f32 %v699, %v718
          %v728 = vmul.f32 %v700, %v722
          %v729 = vmul.f32 %v701, %v718
          %v730 = vmul.f32 %v702, %v722
          %v731 = vmul.f32 %v703, %v718
          %v732 = vmul.f32 %v704, %v722
          %v733 = vmul.f32 %v705, %v718
          %v734 = vmul.f32 %v706, %v722
          %v735 = vmul.f32 %v707, %v718
          %v736 = vmul.f32 %v708, %v722
          %v737 = vmul.f32 %v709, %v718
          %v738 = vmul.f32 %v710, %v722
          %v739 = vmul.f32 %v711, %v718
          %v740 = vmul.f32 %v712, %v722
          %741 = vst [vmem:[#allocation2] sm:$0xff] %v725
          %742 = vst [vmem:[#allocation2 + $0x8] sm:$0xff] %v726
          %743 = vst [vmem:[#allocation2 + $0x10] sm:$0xff] %v727
          %744 = vst [vmem:[#allocation2 + $0x18] sm:$0xff] %v728
          %745 = vst [vmem:[#allocation2 + $0x20] sm:$0xff] %v729
          %746 = vst [vmem:[#allocation2 + $0x28] sm:$0xff] %v730
          %747 = vst [vmem:[#allocation2 + $0x30] sm:$0xff] %v731
          %748 = vst [vmem:[#allocation2 + $0x38] sm:$0xff] %v732
          %749 = vst [vmem:[#allocation2 + $0x40] sm:$0xff] %v733
          %750 = vst [vmem:[#allocation2 + $0x48] sm:$0xff] %v734
          %751 = vst [vmem:[#allocation2 + $0x50] sm:$0xff] %v735
          %752 = vst [vmem:[#allocation2 + $0x58] sm:$0xff] %v736
          %753 = vst [vmem:[#allocation2 + $0x60] sm:$0xff] %v737
          %754 = vst [vmem:[#allocation2 + $0x68] sm:$0xff] %v738
          %755 = vst [vmem:[#allocation2 + $0x70] sm:$0xff] %v739
          %756 = vst [vmem:[#allocation2 + $0x78] sm:$0xff] %v740
        $region80: #{tpu_custom_call.1} parent=47 // pred_fallthru
          _
        %v757 = vld [vmem:[#allocation2] sm:$0xff]
        %v758 = vld [vmem:[#allocation2 + $0x8] sm:$0xff]
        %v759 = vld [vmem:[#allocation2 + $0x10] sm:$0xff]
        %v760 = vld [vmem:[#allocation2 + $0x18] sm:$0xff]
        %v761 = vld [vmem:[#allocation2 + $0x20] sm:$0xff]
        %v762 = vld [vmem:[#allocation2 + $0x28] sm:$0xff]
        %v763 = vld [vmem:[#allocation2 + $0x30] sm:$0xff]
        %v764 = vld [vmem:[#allocation2 + $0x38] sm:$0xff]
        %v765 = vld [vmem:[#allocation2 + $0x40] sm:$0xff]
        %v766 = vld [vmem:[#allocation2 + $0x48] sm:$0xff]
        %v767 = vld [vmem:[#allocation2 + $0x50] sm:$0xff]
        %v768 = vld [vmem:[#allocation2 + $0x58] sm:$0xff]
        %v769 = vld [vmem:[#allocation2 + $0x60] sm:$0xff]
        %v770 = vld [vmem:[#allocation2 + $0x68] sm:$0xff]
        %v771 = vld [vmem:[#allocation2 + $0x70] sm:$0xff]
        %v772 = vld [vmem:[#allocation2 + $0x78] sm:$0xff]
        %v773 = vld [vmem:[%s497] sm:$0xff]
        %v774 = vld [vmem:[%s497 + $0x8] sm:$0xff]
        %v775 = vld [vmem:[%s497 + $0x10] sm:$0xff]
        %v776 = vld [vmem:[%s497 + $0x18] sm:$0xff]
        %v777 = vld [vmem:[%s497 + $0x20] sm:$0xff]
        %v778 = vld [vmem:[%s497 + $0x28] sm:$0xff]
        %v779 = vld [vmem:[%s497 + $0x30] sm:$0xff]
        %v780 = vld [vmem:[%s497 + $0x38] sm:$0xff]
        %v781 = vld [vmem:[%s497 + $0x40] sm:$0xff]
        %v782 = vld [vmem:[%s497 + $0x48] sm:$0xff]
        %v783 = vld [vmem:[%s497 + $0x50] sm:$0xff]
        %v784 = vld [vmem:[%s497 + $0x58] sm:$0xff]
        %v785 = vld [vmem:[%s497 + $0x60] sm:$0xff]
        %v786 = vld [vmem:[%s497 + $0x68] sm:$0xff]
        %v787 = vld [vmem:[%s497 + $0x70] sm:$0xff]
        %v788 = vld [vmem:[%s497 + $0x78] sm:$0xff]
        %v789 = vld [vmem:[%s497 + $0x80] sm:$0xff]
        %v790 = vld [vmem:[%s497 + $0x88] sm:$0xff]
        %v791 = vld [vmem:[%s497 + $0x90] sm:$0xff]
        %v792 = vld [vmem:[%s497 + $0x98] sm:$0xff]
        %v793 = vld [vmem:[%s497 + $0xa0] sm:$0xff]
        %v794 = vld [vmem:[%s497 + $0xa8] sm:$0xff]
        %v795 = vld [vmem:[%s497 + $0xb0] sm:$0xff]
        %v796 = vld [vmem:[%s497 + $0xb8] sm:$0xff]
        %v797 = vld [vmem:[%s497 + $0xc0] sm:$0xff]
        %v798 = vld [vmem:[%s497 + $0xc8] sm:$0xff]
        %v799 = vld [vmem:[%s497 + $0xd0] sm:$0xff]
        %v800 = vld [vmem:[%s497 + $0xd8] sm:$0xff]
        %v801 = vld [vmem:[%s497 + $0xe0] sm:$0xff]
        %v802 = vld [vmem:[%s497 + $0xe8] sm:$0xff]
        %v803 = vld [vmem:[%s497 + $0xf0] sm:$0xff]
        %v804 = vld [vmem:[%s497 + $0xf8] sm:$0xff]
        %v805 = vld [vmem:[%s497 + $0x100] sm:$0xff]
        %v806 = vld [vmem:[%s497 + $0x108] sm:$0xff]
        %v807 = vld [vmem:[%s497 + $0x110] sm:$0xff]
        %v808 = vld [vmem:[%s497 + $0x118] sm:$0xff]
        %v809 = vld [vmem:[%s497 + $0x120] sm:$0xff]
        %v810 = vld [vmem:[%s497 + $0x128] sm:$0xff]
        %v811 = vld [vmem:[%s497 + $0x130] sm:$0xff]
        %v812 = vld [vmem:[%s497 + $0x138] sm:$0xff]
        %v813 = vld [vmem:[%s497 + $0x140] sm:$0xff]
        %v814 = vld [vmem:[%s497 + $0x148] sm:$0xff]
        %v815 = vld [vmem:[%s497 + $0x150] sm:$0xff]
        %v816 = vld [vmem:[%s497 + $0x158] sm:$0xff]
        %v817 = vld [vmem:[%s497 + $0x160] sm:$0xff]
        %v818 = vld [vmem:[%s497 + $0x168] sm:$0xff]
        %v819 = vld [vmem:[%s497 + $0x170] sm:$0xff]
        %v820 = vld [vmem:[%s497 + $0x178] sm:$0xff]
        %v821 = vld [vmem:[%s497 + $0x180] sm:$0xff]
        %v822 = vld [vmem:[%s497 + $0x188] sm:$0xff]
        %v823 = vld [vmem:[%s497 + $0x190] sm:$0xff]
        %v824 = vld [vmem:[%s497 + $0x198] sm:$0xff]
        %v825 = vld [vmem:[%s497 + $0x1a0] sm:$0xff]
        %v826 = vld [vmem:[%s497 + $0x1a8] sm:$0xff]
        %v827 = vld [vmem:[%s497 + $0x1b0] sm:$0xff]
        %v828 = vld [vmem:[%s497 + $0x1b8] sm:$0xff]
        %v829 = vld [vmem:[%s497 + $0x1c0] sm:$0xff]
        %v830 = vld [vmem:[%s497 + $0x1c8] sm:$0xff]
        %v831 = vld [vmem:[%s497 + $0x1d0] sm:$0xff]
        %v832 = vld [vmem:[%s497 + $0x1d8] sm:$0xff]
        %v833 = vld [vmem:[%s497 + $0x1e0] sm:$0xff]
        %v834 = vld [vmem:[%s497 + $0x1e8] sm:$0xff]
        %v835 = vld [vmem:[%s497 + $0x1f0] sm:$0xff]
        %v836 = vld [vmem:[%s497 + $0x1f8] sm:$0xff]
        %v837 = vld [vmem:[%s497 + $0x200] sm:$0xff]
        %v838 = vld [vmem:[%s497 + $0x208] sm:$0xff]
        %v839 = vld [vmem:[%s497 + $0x210] sm:$0xff]
        %v840 = vld [vmem:[%s497 + $0x218] sm:$0xff]
        %v841 = vld [vmem:[%s497 + $0x220] sm:$0xff]
        %v842 = vld [vmem:[%s497 + $0x228] sm:$0xff]
        %v843 = vld [vmem:[%s497 + $0x230] sm:$0xff]
        %v844 = vld [vmem:[%s497 + $0x238] sm:$0xff]
        %v845 = vld [vmem:[%s497 + $0x240] sm:$0xff]
        %v846 = vld [vmem:[%s497 + $0x248] sm:$0xff]
        %v847 = vld [vmem:[%s497 + $0x250] sm:$0xff]
        %v848 = vld [vmem:[%s497 + $0x258] sm:$0xff]
        %v849 = vld [vmem:[%s497 + $0x260] sm:$0xff]
        %v850 = vld [vmem:[%s497 + $0x268] sm:$0xff]
        %v851 = vld [vmem:[%s497 + $0x270] sm:$0xff]
        %v852 = vld [vmem:[%s497 + $0x278] sm:$0xff]
        %v853 = vld [vmem:[%s497 + $0x280] sm:$0xff]
        %v854 = vld [vmem:[%s497 + $0x288] sm:$0xff]
        %v855 = vld [vmem:[%s497 + $0x290] sm:$0xff]
        %v856 = vld [vmem:[%s497 + $0x298] sm:$0xff]
        %v857 = vld [vmem:[%s497 + $0x2a0] sm:$0xff]
        %v858 = vld [vmem:[%s497 + $0x2a8] sm:$0xff]
        %v859 = vld [vmem:[%s497 + $0x2b0] sm:$0xff]
        %v860 = vld [vmem:[%s497 + $0x2b8] sm:$0xff]
        %v861 = vld [vmem:[%s497 + $0x2c0] sm:$0xff]
        %v862 = vld [vmem:[%s497 + $0x2c8] sm:$0xff]
        %v863 = vld [vmem:[%s497 + $0x2d0] sm:$0xff]
        %v864 = vld [vmem:[%s497 + $0x2d8] sm:$0xff]
        %v865 = vld [vmem:[%s497 + $0x2e0] sm:$0xff]
        %v866 = vld [vmem:[%s497 + $0x2e8] sm:$0xff]
        %v867 = vld [vmem:[%s497 + $0x2f0] sm:$0xff]
        %v868 = vld [vmem:[%s497 + $0x2f8] sm:$0xff]
        %869 = vmatprep.subr.mxu0 %v819
        %870 = vmatpush1.msra.mxu0 %v818
        %871 = vmatprep.subr.mxu0 %v816
        %872 = vmatpush1.msra.mxu0 %v815
        %873 = vmatprep.subr.mxu0 %v813
        %874 = vmatpush1.msra.mxu0 %v812
        %875 = vmatprep.subr.mxu0 %v810
        %876 = vmatpush1.msra.mxu0 %v809
        %877 = vmatprep.subr.mxu0 %v807
        %878 = vmatpush1.msra.mxu0 %v806
        %879 = vmatprep.subr.mxu0 %v804
        %880 = vmatpush1.msra.mxu0 %v803
        %881 = vmatprep.subr.mxu0 %v801
        %882 = vmatpush1.msra.mxu0 %v800
        %883 = vmatprep.subr.mxu0 %v798
        %884 = vmatpush1.msra.mxu0 %v797
        %885 = vmatprep.subr.mxu0 %v795
        %886 = vmatpush1.msra.mxu0 %v794
        %887 = vmatprep.subr.mxu0 %v792
        %888 = vmatpush1.msra.mxu0 %v791
        %889 = vmatprep.subr.mxu0 %v789
        %890 = vmatpush1.msra.mxu0 %v788
        %891 = vmatprep.subr.mxu0 %v786
        %892 = vmatpush1.msra.mxu0 %v785
        %893 = vmatprep.subr.mxu0 %v783
        %894 = vmatpush1.msra.mxu0 %v782
        %895 = vmatprep.subr.mxu0 %v780
        %896 = vmatpush1.msra.mxu0 %v779
        %897 = vmatprep.subr.mxu0 %v777
        %898 = vmatpush1.msra.mxu0 %v776
        %899 = vmatprep.subr.mxu0 %v774
        %900 = vmatpush1.msra.mxu0 %v773
        %901 = vmatprep.subr.mxu0 %v867
        %902 = vmatpush2.msra.mxu0 %v866
        %903 = vmatprep.subr.mxu0 %v864
        %904 = vmatpush2.msra.mxu0 %v863
        %905 = vmatprep.subr.mxu0 %v861
        %906 = vmatpush2.msra.mxu0 %v860
        %907 = vmatprep.subr.mxu0 %v858
        %908 = vmatpush2.msra.mxu0 %v857
        %909 = vmatprep.subr.mxu0 %v855
        %910 = vmatpush2.msra.mxu0 %v854
        %911 = vmatprep.subr.mxu0 %v852
        %912 = vmatpush2.msra.mxu0 %v851
        %913 = vmatprep.subr.mxu0 %v849
        %914 = vmatpush2.msra.mxu0 %v848
        %915 = vmatprep.subr.mxu0 %v846
        %916 = vmatpush2.msra.mxu0 %v845
        %917 = vmatprep.subr.mxu0 %v843
        %918 = vmatpush2.msra.mxu0 %v842
        %919 = vmatprep.subr.mxu0 %v840
        %920 = vmatpush2.msra.mxu0 %v839
        %921 = vmatprep.subr.mxu0 %v837
        %922 = vmatpush2.msra.mxu0 %v836
        %923 = vmatprep.subr.mxu0 %v834
        %924 = vmatpush2.msra.mxu0 %v833
        %925 = vmatprep.subr.mxu0 %v831
        %926 = vmatpush2.msra.mxu0 %v830
        %927 = vmatprep.subr.mxu0 %v828
        %928 = vmatpush2.msra.mxu0 %v827
        %929 = vmatprep.subr.mxu0 %v825
        %930 = vmatpush2.msra.mxu0 %v824
        %931 = vmatprep.subr.mxu0 %v822
        %932 = vmatpush2.msra.mxu0 %v821
        %933 = vmatprep.mubr.f32.mxu0 %v758
        %934 = vmatmul.mubr.f32.gmra.mxu0 %v757
        %v935 = vpop.f32.mrf.mxu0
        %v936 = vadd.f32 0.0, %v935
        %v937 = vpop.f32.mrf.mxu0
        %v938 = vadd.f32 0.0, %v937
        %939 = vmatprep.mubr.f32.mxu0 %v760
        %940 = vmatmul.mubr.f32.gmra.mxu0 %v759
        %v941 = vpop.f32.mrf.mxu0
        %v942 = vadd.f32 0.0, %v941
        %v943 = vpop.f32.mrf.mxu0
        %v944 = vadd.f32 0.0, %v943
        %945 = vmatprep.mubr.f32.mxu0 %v762
        %946 = vmatmul.mubr.f32.gmra.mxu0 %v761
        %v947 = vpop.f32.mrf.mxu0
        %v948 = vadd.f32 0.0, %v947
        %v949 = vpop.f32.mrf.mxu0
        %v950 = vadd.f32 0.0, %v949
        %951 = vmatprep.mubr.f32.mxu0 %v764
        %952 = vmatmul.mubr.f32.gmra.mxu0 %v763
        %v953 = vpop.f32.mrf.mxu0
        %v954 = vadd.f32 0.0, %v953
        %v955 = vpop.f32.mrf.mxu0
        %v956 = vadd.f32 0.0, %v955
        %957 = vmatprep.mubr.f32.mxu0 %v766
        %958 = vmatmul.mubr.f32.gmra.mxu0 %v765
        %v959 = vpop.f32.mrf.mxu0
        %v960 = vadd.f32 0.0, %v959
        %v961 = vpop.f32.mrf.mxu0
        %v962 = vadd.f32 0.0, %v961
        %963 = vmatprep.mubr.f32.mxu0 %v768
        %964 = vmatmul.mubr.f32.gmra.mxu0 %v767
        %v965 = vpop.f32.mrf.mxu0
        %v966 = vadd.f32 0.0, %v965
        %v967 = vpop.f32.mrf.mxu0
        %v968 = vadd.f32 0.0, %v967
        %969 = vmatprep.mubr.f32.mxu0 %v770
        %970 = vmatmul.mubr.f32.gmra.mxu0 %v769
        %v971 = vpop.f32.mrf.mxu0
        %v972 = vadd.f32 0.0, %v971
        %v973 = vpop.f32.mrf.mxu0
        %v974 = vadd.f32 0.0, %v973
        %975 = vmatprep.mubr.f32.mxu0 %v772
        %976 = vmatmul.mubr.f32.gmra.mxu0 %v771
        %v977 = vpop.f32.mrf.mxu0
        %v978 = vadd.f32 0.0, %v977
        %v979 = vpop.f32.mrf.mxu0
        %v980 = vadd.f32 0.0, %v979
        %981 = vdwg.mxu0
        %982 = vmatprep.subr.mxu0 0.0
        %983 = vmatpush1.msra.mxu0 %v820
        %984 = vmatprep.subr.mxu0 0.0
        %985 = vmatpush1.msra.mxu0 %v817
        %986 = vmatprep.subr.mxu0 0.0
        %987 = vmatpush1.msra.mxu0 %v814
        %988 = vmatprep.subr.mxu0 0.0
        %989 = vmatpush1.msra.mxu0 %v811
        %990 = vmatprep.subr.mxu0 0.0
        %991 = vmatpush1.msra.mxu0 %v808
        %992 = vmatprep.subr.mxu0 0.0
        %993 = vmatpush1.msra.mxu0 %v805
        %994 = vmatprep.subr.mxu0 0.0
        %995 = vmatpush1.msra.mxu0 %v802
        %996 = vmatprep.subr.mxu0 0.0
        %997 = vmatpush1.msra.mxu0 %v799
        %998 = vmatprep.subr.mxu0 0.0
        %999 = vmatpush1.msra.mxu0 %v796
        %1000 = vmatprep.subr.mxu0 0.0
        %1001 = vmatpush1.msra.mxu0 %v793
        %1002 = vmatprep.subr.mxu0 0.0
        %1003 = vmatpush1.msra.mxu0 %v790
        %1004 = vmatprep.subr.mxu0 0.0
        %1005 = vmatpush1.msra.mxu0 %v787
        %1006 = vmatprep.subr.mxu0 0.0
        %1007 = vmatpush1.msra.mxu0 %v784
        %1008 = vmatprep.subr.mxu0 0.0
        %1009 = vmatpush1.msra.mxu0 %v781
        %1010 = vmatprep.subr.mxu0 0.0
        %1011 = vmatpush1.msra.mxu0 %v778
        %1012 = vmatprep.subr.mxu0 0.0
        %1013 = vmatpush1.msra.mxu0 %v775
        %1014 = vmatprep.subr.mxu0 0.0
        %1015 = vmatpush2.msra.mxu0 %v868
        %1016 = vmatprep.subr.mxu0 0.0
        %1017 = vmatpush2.msra.mxu0 %v865
        %1018 = vmatprep.subr.mxu0 0.0
        %1019 = vmatpush2.msra.mxu0 %v862
        %1020 = vmatprep.subr.mxu0 0.0
        %1021 = vmatpush2.msra.mxu0 %v859
        %1022 = vmatprep.subr.mxu0 0.0
        %1023 = vmatpush2.msra.mxu0 %v856
        %1024 = vmatprep.subr.mxu0 0.0
        %1025 = vmatpush2.msra.mxu0 %v853
        %1026 = vmatprep.subr.mxu0 0.0
        %1027 = vmatpush2.msra.mxu0 %v850
        %1028 = vmatprep.subr.mxu0 0.0
        %1029 = vmatpush2.msra.mxu0 %v847
        %1030 = vmatprep.subr.mxu0 0.0
        %1031 = vmatpush2.msra.mxu0 %v844
        %1032 = vmatprep.subr.mxu0 0.0
        %1033 = vmatpush2.msra.mxu0 %v841
        %1034 = vmatprep.subr.mxu0 0.0
        %1035 = vmatpush2.msra.mxu0 %v838
        %1036 = vmatprep.subr.mxu0 0.0
        %1037 = vmatpush2.msra.mxu0 %v835
        %1038 = vmatprep.subr.mxu0 0.0
        %1039 = vmatpush2.msra.mxu0 %v832
        %1040 = vmatprep.subr.mxu0 0.0
        %1041 = vmatpush2.msra.mxu0 %v829
        %1042 = vmatprep.subr.mxu0 0.0
        %1043 = vmatpush2.msra.mxu0 %v826
        %1044 = vmatprep.subr.mxu0 0.0
        %1045 = vmatpush2.msra.mxu0 %v823
        %1046 = vmatprep.mubr.f32.mxu0 %v758
        %1047 = vmatmul.mubr.f32.gmra.mxu0 %v757
        %v1048 = vpop.f32.mrf.mxu0
        %v1049 = vadd.f32 0.0, %v1048
        %v1050 = vpop.f32.mrf.mxu0
        %1051 = vmatprep.mubr.f32.mxu0 %v760
        %1052 = vmatmul.mubr.f32.gmra.mxu0 %v759
        %v1053 = vpop.f32.mrf.mxu0
        %v1054 = vadd.f32 0.0, %v1053
        %v1055 = vpop.f32.mrf.mxu0
        %1056 = vmatprep.mubr.f32.mxu0 %v762
        %1057 = vmatmul.mubr.f32.gmra.mxu0 %v761
        %v1058 = vpop.f32.mrf.mxu0
        %v1059 = vadd.f32 0.0, %v1058
        %v1060 = vpop.f32.mrf.mxu0
        %1061 = vmatprep.mubr.f32.mxu0 %v764
        %1062 = vmatmul.mubr.f32.gmra.mxu0 %v763
        %v1063 = vpop.f32.mrf.mxu0
        %v1064 = vadd.f32 0.0, %v1063
        %v1065 = vpop.f32.mrf.mxu0
        %1066 = vmatprep.mubr.f32.mxu0 %v766
        %1067 = vmatmul.mubr.f32.gmra.mxu0 %v765
        %v1068 = vpop.f32.mrf.mxu0
        %v1069 = vadd.f32 0.0, %v1068
        %v1070 = vpop.f32.mrf.mxu0
        %1071 = vmatprep.mubr.f32.mxu0 %v768
        %1072 = vmatmul.mubr.f32.gmra.mxu0 %v767
        %v1073 = vpop.f32.mrf.mxu0
        %v1074 = vadd.f32 0.0, %v1073
        %v1075 = vpop.f32.mrf.mxu0
        %1076 = vmatprep.mubr.f32.mxu0 %v770
        %1077 = vmatmul.mubr.f32.gmra.mxu0 %v769
        %v1078 = vpop.f32.mrf.mxu0
        %v1079 = vadd.f32 0.0, %v1078
        %v1080 = vpop.f32.mrf.mxu0
        %1081 = vmatprep.mubr.f32.mxu0 %v772
        %1082 = vmatmul.mubr.f32.gmra.mxu0 %v771
        %v1083 = vpop.f32.mrf.mxu0
        %v1084 = vadd.f32 0.0, %v1083
        %v1085 = vpop.f32.mrf.mxu0
        %1086 = vdwg.mxu0
        %v1087 = vld [vmem:[%s506] sm:$0xff]
        %v1088 = vld [vmem:[%s506 + $0x8] sm:$0xff]
        %v1089 = vld [vmem:[%s506 + $0x10] sm:$0xff]
        %v1090 = vld [vmem:[%s506 + $0x18] sm:$0xff]
        %v1091 = vld [vmem:[%s506 + $0x20] sm:$0xff]
        %v1092 = vld [vmem:[%s506 + $0x28] sm:$0xff]
        %v1093 = vld [vmem:[%s506 + $0x30] sm:$0xff]
        %v1094 = vld [vmem:[%s506 + $0x38] sm:$0xff]
        %v1095 = vmul.f32 %v936, %v1087
        %v1096 = vmul.f32 %v942, %v1088
        %v1097 = vmul.f32 %v948, %v1089
        %v1098 = vmul.f32 %v954, %v1090
        %v1099 = vmul.f32 %v960, %v1091
        %v1100 = vmul.f32 %v966, %v1092
        %v1101 = vmul.f32 %v972, %v1093
        %v1102 = vmul.f32 %v978, %v1094
        %1103 = vrot.lane.b32.xlu0 %v936, 64
        %v1104 = vpop.permute.xlu0 %1103
        %1105 = vrot.lane.b32.xlu0 %v942, 64
        %v1106 = vpop.permute.xlu0 %1105
        %1107 = vrot.lane.b32.xlu0 %v948, 64
        %v1108 = vpop.permute.xlu0 %1107
        %1109 = vrot.lane.b32.xlu0 %v954, 64
        %v1110 = vpop.permute.xlu0 %1109
        %1111 = vrot.lane.b32.xlu0 %v960, 64
        %v1112 = vpop.permute.xlu0 %1111
        %1113 = vrot.lane.b32.xlu0 %v966, 64
        %v1114 = vpop.permute.xlu0 %1113
        %1115 = vrot.lane.b32.xlu0 %v972, 64
        %v1116 = vpop.permute.xlu0 %1115
        %1117 = vrot.lane.b32.xlu0 %v978, 64
        %v1118 = vpop.permute.xlu0 %1117
        %v1119 = vld [vmem:[%s515] sm:$0xff]
        %v1120 = vld [vmem:[%s515 + $0x8] sm:$0xff]
        %v1121 = vld [vmem:[%s515 + $0x10] sm:$0xff]
        %v1122 = vld [vmem:[%s515 + $0x18] sm:$0xff]
        %v1123 = vld [vmem:[%s515 + $0x20] sm:$0xff]
        %v1124 = vld [vmem:[%s515 + $0x28] sm:$0xff]
        %v1125 = vld [vmem:[%s515 + $0x30] sm:$0xff]
        %v1126 = vld [vmem:[%s515 + $0x38] sm:$0xff]
        %v1127 = vmul.f32 %v1104, %v1119
        %v1128 = vmul.f32 %v1106, %v1120
        %v1129 = vmul.f32 %v1108, %v1121
        %v1130 = vmul.f32 %v1110, %v1122
        %v1131 = vmul.f32 %v1112, %v1123
        %v1132 = vmul.f32 %v1114, %v1124
        %v1133 = vmul.f32 %v1116, %v1125
        %v1134 = vmul.f32 %v1118, %v1126
        %v1135 = vadd.f32 %v1095, %v1127
        %v1136 = vadd.f32 %v1096, %v1128
        %v1137 = vadd.f32 %v1097, %v1129
        %v1138 = vadd.f32 %v1098, %v1130
        %v1139 = vadd.f32 %v1099, %v1131
        %v1140 = vadd.f32 %v1100, %v1132
        %v1141 = vadd.f32 %v1101, %v1133
        %v1142 = vadd.f32 %v1102, %v1134
        %v1143 = vld [vmem:[%s524] sm:$0xff]
        %v1144 = vld [vmem:[%s524 + $0x8] sm:$0xff]
        %v1145 = vld [vmem:[%s524 + $0x10] sm:$0xff]
        %v1146 = vld [vmem:[%s524 + $0x18] sm:$0xff]
        %v1147 = vld [vmem:[%s524 + $0x20] sm:$0xff]
        %v1148 = vld [vmem:[%s524 + $0x28] sm:$0xff]
        %v1149 = vld [vmem:[%s524 + $0x30] sm:$0xff]
        %v1150 = vld [vmem:[%s524 + $0x38] sm:$0xff]
        %v1151 = vmul.f32 %v938, %v1143
        %v1152 = vmul.f32 %v944, %v1144
        %v1153 = vmul.f32 %v950, %v1145
        %v1154 = vmul.f32 %v956, %v1146
        %v1155 = vmul.f32 %v962, %v1147
        %v1156 = vmul.f32 %v968, %v1148
        %v1157 = vmul.f32 %v974, %v1149
        %v1158 = vmul.f32 %v980, %v1150
        %1159 = vrot.lane.b32.xlu0 %v938, 64
        %v1160 = vpop.permute.xlu0 %1159
        %1161 = vrot.lane.b32.xlu0 %v944, 64
        %v1162 = vpop.permute.xlu0 %1161
        %1163 = vrot.lane.b32.xlu0 %v950, 64
        %v1164 = vpop.permute.xlu0 %1163
        %1165 = vrot.lane.b32.xlu0 %v956, 64
        %v1166 = vpop.permute.xlu0 %1165
        %1167 = vrot.lane.b32.xlu0 %v962, 64
        %v1168 = vpop.permute.xlu0 %1167
        %1169 = vrot.lane.b32.xlu0 %v968, 64
        %v1170 = vpop.permute.xlu0 %1169
        %1171 = vrot.lane.b32.xlu0 %v974, 64
        %v1172 = vpop.permute.xlu0 %1171
        %1173 = vrot.lane.b32.xlu0 %v980, 64
        %v1174 = vpop.permute.xlu0 %1173
        %v1175 = vld [vmem:[%s533] sm:$0xff]
        %v1176 = vld [vmem:[%s533 + $0x8] sm:$0xff]
        %v1177 = vld [vmem:[%s533 + $0x10] sm:$0xff]
        %v1178 = vld [vmem:[%s533 + $0x18] sm:$0xff]
        %v1179 = vld [vmem:[%s533 + $0x20] sm:$0xff]
        %v1180 = vld [vmem:[%s533 + $0x28] sm:$0xff]
        %v1181 = vld [vmem:[%s533 + $0x30] sm:$0xff]
        %v1182 = vld [vmem:[%s533 + $0x38] sm:$0xff]
        %v1183 = vmul.f32 %v1160, %v1175
        %v1184 = vmul.f32 %v1162, %v1176
        %v1185 = vmul.f32 %v1164, %v1177
        %v1186 = vmul.f32 %v1166, %v1178
        %v1187 = vmul.f32 %v1168, %v1179
        %v1188 = vmul.f32 %v1170, %v1180
        %v1189 = vmul.f32 %v1172, %v1181
        %v1190 = vmul.f32 %v1174, %v1182
        %v1191 = vadd.f32 %v1151, %v1183
        %v1192 = vadd.f32 %v1152, %v1184
        %v1193 = vadd.f32 %v1153, %v1185
        %v1194 = vadd.f32 %v1154, %v1186
        %v1195 = vadd.f32 %v1155, %v1187
        %v1196 = vadd.f32 %v1156, %v1188
        %v1197 = vadd.f32 %v1157, %v1189
        %v1198 = vadd.f32 %v1158, %v1190
        %1199 = vst [vmem:[%s588] sm:$0xff] %v1135
        %1200 = vst [vmem:[%s588 + $0x8] sm:$0xff] %v1136
        %1201 = vst [vmem:[%s588 + $0x10] sm:$0xff] %v1137
        %1202 = vst [vmem:[%s588 + $0x18] sm:$0xff] %v1138
        %1203 = vst [vmem:[%s588 + $0x20] sm:$0xff] %v1139
        %1204 = vst [vmem:[%s588 + $0x28] sm:$0xff] %v1140
        %1205 = vst [vmem:[%s588 + $0x30] sm:$0xff] %v1141
        %1206 = vst [vmem:[%s588 + $0x38] sm:$0xff] %v1142
        %1207 = vst [vmem:[%s595] sm:$0xff] %v1191
        %1208 = vst [vmem:[%s595 + $0x8] sm:$0xff] %v1192
        %1209 = vst [vmem:[%s595 + $0x10] sm:$0xff] %v1193
        %1210 = vst [vmem:[%s595 + $0x18] sm:$0xff] %v1194
        %1211 = vst [vmem:[%s595 + $0x20] sm:$0xff] %v1195
        %1212 = vst [vmem:[%s595 + $0x28] sm:$0xff] %v1196
        %1213 = vst [vmem:[%s595 + $0x30] sm:$0xff] %v1197
        %1214 = vst [vmem:[%s595 + $0x38] sm:$0xff] %v1198
        %1215 = vst [vmem:[%s602] sm:$0xff] %v1049
        %1216 = vst [vmem:[%s602 + $0x8] sm:$0xff] %v1054
        %1217 = vst [vmem:[%s602 + $0x10] sm:$0xff] %v1059
        %1218 = vst [vmem:[%s602 + $0x18] sm:$0xff] %v1064
        %1219 = vst [vmem:[%s602 + $0x20] sm:$0xff] %v1069
        %1220 = vst [vmem:[%s602 + $0x28] sm:$0xff] %v1074
        %1221 = vst [vmem:[%s602 + $0x30] sm:$0xff] %v1079
        %1222 = vst [vmem:[%s602 + $0x38] sm:$0xff] %v1084
        %s1223 = sand.u32 %s241, 1
        %s1224 = scalar_lea.sflag [#allocation5], %s1223
        %s1225 = sand.u32 %s241, 1
        %s1226 = smul.addr %s1225, 64
        %s1227 = scalar_lea.vmem [#allocation13], %s1226
        %s1228 = sand.u32 %s31, 1
        %s1229 = scalar_lea.sflag [#allocation15], %s1228
        %s1230 = sand.u32 %s271, 1
        %s1231 = smul.addr %s1230, 64
        %s1232 = scalar_lea.vmem [#allocation14], %s1231
        %s1233 = sand.u32 %s31, 1
        %s1234 = scalar_lea.sflag [#allocation15], %s1233
        %s1235 = sand.u32 %s301, 1
        %s1236 = smul.addr %s1235, 64
        %s1237 = scalar_lea.vmem [#allocation16], %s1236
        // Predicated region
        $region81: #{tpu_custom_call.1} parent=47 // pred_check
          %p1238 = pneg %p251
        $region82: #{tpu_custom_call.1} parent=47 // pred_check_branch
          %1240 = sbr.rel (%p1238) target = $region84
        $region83: #{tpu_custom_call.1} parent=47 // pred_region
          %s1241 = smul.u32 8, %s37
          %s1243 = ssub.s32 1024, 1024
          %1244 = vsyncadd %s1224, %s1243
          %s1245 = smul.addr %s1241, 2
          %s1246 = sadd.s32 %s38, %s1245
          %s1247 = smul.addr %s36, 32
          %s1248 = sadd.s32 %s1246, %s1247
          %s1249 = smul.addr %s1248, 128
          %s1250 = scalar_lea.hbm %s7, %s1249
          %s1251 = sshll.u32 %s1227, 4
          %s1252 = int_to_ptr.vmem [resolvable:$true] %s1251
          %1257 = dma.vmem_to_hbm [thread:$0]  %s1252, 1024, %s1250, %s1224, 128, 256, 8
        $region84: #{tpu_custom_call.1} parent=47 // pred_fallthru
          _
        // Predicated region
        $region85: #{tpu_custom_call.1} parent=47 // pred_check
          %p1258 = pneg %p281
        $region86: #{tpu_custom_call.1} parent=47 // pred_check_branch
          %1260 = sbr.rel (%p1258) target = $region88
        $region87: #{tpu_custom_call.1} parent=47 // pred_region
          %s1261 = smul.u32 8, %s37
          %s1263 = ssub.s32 1024, 1024
          %1264 = vsyncadd %s1229, %s1263
          %s1265 = smul.addr %s1261, 2
          %s1266 = sadd.s32 %s38, %s1265
          %s1267 = smul.addr %s36, 32
          %s1268 = sadd.s32 %s1266, %s1267
          %s1269 = smul.addr %s1268, 128
          %s1270 = scalar_lea.hbm %s8, %s1269
          %s1271 = sshll.u32 %s1232, 4
          %s1272 = int_to_ptr.vmem [resolvable:$true] %s1271
          %1277 = dma.vmem_to_hbm [thread:$0]  %s1272, 1024, %s1270, %s1229, 128, 256, 8
        $region88: #{tpu_custom_call.1} parent=47 // pred_fallthru
          _
        // Predicated region
        $region89: #{tpu_custom_call.1} parent=47 // pred_check
          %p1278 = pneg %p311
        $region90: #{tpu_custom_call.1} parent=47 // pred_check_branch
          %1280 = sbr.rel (%p1278) target = $region92
        $region91: #{tpu_custom_call.1} parent=47 // pred_region
          %s1281 = smul.u32 8, %s37
          %s1283 = ssub.s32 1024, 1024
          %1284 = vsyncadd %s1234, %s1283
          %s1285 = smul.addr %s1281, 2
          %s1286 = sadd.s32 %s38, %s1285
          %s1287 = smul.addr %s36, 32
          %s1288 = sadd.s32 %s1286, %s1287
          %s1289 = smul.addr %s1288, 128
          %s1290 = scalar_lea.hbm %s9, %s1289
          %s1291 = sshll.u32 %s1237, 4
          %s1292 = int_to_ptr.vmem [resolvable:$true] %s1291
          %1297 = dma.vmem_to_hbm [thread:$0]  %s1292, 1024, %s1290, %s1234, 128, 256, 8
        $region92: #{tpu_custom_call.1} parent=47 // pred_fallthru
          _
      $region48: #{tpu_custom_call.1} parent=5 // pred_fallthru
        _
      %p1298 = scmp.le.s32.totalorder 2, %s26
      // Predicated region
      $region93: #{tpu_custom_call.1} parent=5 // pred_check
        %p1299 = pneg %p1298
      $region94: #{tpu_custom_call.1} parent=5 // pred_check_branch
        %1301 = sbr.rel (%p1299) target = $region96
      $region95: #{tpu_custom_call.1} parent=5 // pred_region
        %s1302 = ssub.s32 %s26, 2
        // Predicated region
        $region97: #{tpu_custom_call.1} parent=95 // pred_check
          %p1303 = pneg %p257
        $region98: #{tpu_custom_call.1} parent=95 // pred_check_branch
          %1305 = sbr.rel (%p1303) target = $region100
        $region99: #{tpu_custom_call.1} parent=95 // pred_region
          %s1306 = sand.u32 %s242, 1
          %s1307 = scalar_lea.sflag [#allocation5], %s1306
          %s1308 = sand.u32 %s242, 1
          %s1309 = smul.addr %s1308, 64
          %s1310 = scalar_lea.vmem [#allocation13], %s1309
          %1311 = dma.done %s1307, 1024
        $region100: #{tpu_custom_call.1} parent=95 // pred_fallthru
          _
        // Predicated region
        $region101: #{tpu_custom_call.1} parent=95 // pred_check
          %p1312 = pneg %p287
        $region102: #{tpu_custom_call.1} parent=95 // pred_check_branch
          %1314 = sbr.rel (%p1312) target = $region104
        $region103: #{tpu_custom_call.1} parent=95 // pred_region
          %s1315 = sand.u32 %s32, 1
          %s1316 = scalar_lea.sflag [#allocation15], %s1315
          %s1317 = sand.u32 %s272, 1
          %s1318 = smul.addr %s1317, 64
          %s1319 = scalar_lea.vmem [#allocation14], %s1318
          %1320 = dma.done %s1316, 1024
        $region104: #{tpu_custom_call.1} parent=95 // pred_fallthru
          _
        // Predicated region
        $region105: #{tpu_custom_call.1} parent=95 // pred_check
          %p1321 = pneg %p317
        $region106: #{tpu_custom_call.1} parent=95 // pred_check_branch
          %1323 = sbr.rel (%p1321) target = $region108
        $region107: #{tpu_custom_call.1} parent=95 // pred_region
          %s1324 = sand.u32 %s32, 1
          %s1325 = scalar_lea.sflag [#allocation15], %s1324
          %s1326 = sand.u32 %s302, 1
          %s1327 = smul.addr %s1326, 64
          %s1328 = scalar_lea.vmem [#allocation16], %s1327
          %1329 = dma.done %s1325, 1024
        $region108: #{tpu_custom_call.1} parent=95 // pred_fallthru
          _
      $region96: #{tpu_custom_call.1} parent=5 // pred_fallthru
        _
    $region6: #{tpu_custom_call.1} parent=1 // loop_footer
      %s30 = sadd.s32 1, %s26
    $region7: #{tpu_custom_call.1} parent=1 // loop_footer_branch
      %25 = sbr.rel target = $region3
    $region8: #{tpu_custom_call.1} parent=1 // loop_exit
      _
    %1330 = vsyncpa [#allocation4], 1
    %s1331 = scalar_lea.sflag [#allocation4], 1
    %1332 = vsyncpa %s1331, 1
    %1333 = vsyncpa [#allocation7], 1
    %1334 = vsyncpa [#allocation5], 1
    %s1335 = scalar_lea.sflag [#allocation5], 1
    %1336 = vsyncpa %s1335, 1
    %1337 = vsyncpa [#allocation15], 1
    %s1338 = scalar_lea.sflag [#allocation15], 1
    %1339 = vsyncpa %s1338, 1

</llo_original>
